<compile_context>
chip_gen: v7x
topology: tpu7x:2x2x1
jax: 0.10.0
libtpu: 0.0.40
codegen_flags: <defaults>
</compile_context>

<pallas_src>
import jax
import jax.numpy as jnp
from jax.experimental import pallas as pl
from jax.experimental.pallas import tpu as pltpu


def _round_up(n, m):
    return ((n + m - 1) // m) * m


# ----------------------------------------------------------------------------
# Kernel: hoisted input projection + LSTM recurrence + 2-layer ReLU FFN.
# Runs once per batch tile (grid axis 0).
# ----------------------------------------------------------------------------
def sdf_kernel(x_ref, w_ih_t_ref, w_hh_t_ref, b_ref,
               w1_t_ref, b1_ref, w2_t_ref, b2_ref, out_ref, gx_ref):
    # x_ref    : (S, Bt, I)   time-major input tile
    # w_ih_t   : (I, G)       gate-padded, transposed input weights
    # w_hh_t   : (HP, G)      gate-padded, transposed recurrent weights
    # b_ref    : (1, G)       combined b_ih + b_hh, gate-padded
    # w1_t     : (HP, HfP)    FFN layer 1 (lane-padded)
    # w2_t     : (HfP, OP)    FFN layer 2 (lane-padded)
    # out_ref  : (Bt, OP)
    # gx_ref   : (S, Bt, G)   VMEM scratch for the hoisted projection
    S, Bt, G = gx_ref.shape
    HP = G // 4

    # ---- hoisted time-parallel input projection: ONE MXU matmul over all
    # (t, b) rows, then ONE aligned whole-tile store into the scratch. ----
    x2d = x_ref[...].reshape(S * Bt, x_ref.shape[-1])
    gx = jnp.dot(x2d, w_ih_t_ref[...],
                 preferred_element_type=jnp.float32) + b_ref[...]      # (S*Bt, G)
    gx_ref[...] = gx.reshape(S, Bt, G)

    h0 = jnp.zeros((Bt, HP), jnp.float32)
    c0 = jnp.zeros((Bt, HP), jnp.float32)

    def step(t, carry):
        h, c = carry
        # Single in-loop matmul on the serial path.  W_hh is read from the
        # ref every step (streamed from VMEM -> MXU push), not held live
        # across the unrolled body.  Gate blocks are 128-lane aligned, so
        # the four slices below are whole-vreg selections (no XLU shuffles).
        gates = gx_ref[t] + jnp.dot(h, w_hh_t_ref[...],
                                    preferred_element_type=jnp.float32)  # (Bt, G)
        i_g = jax.nn.sigmoid(gates[:, 0 * HP:1 * HP])
        f_g = jax.nn.sigmoid(gates[:, 1 * HP:2 * HP])
        g_g = jnp.tanh(gates[:, 2 * HP:3 * HP])
        o_g = jax.nn.sigmoid(gates[:, 3 * HP:4 * HP])
        c_new = f_g * c + i_g * g_g
        h_new = o_g * jnp.tanh(c_new)
        return (h_new, c_new)

    # Unroll (capped at 8) so the LLO scheduler can co-issue EUP / VPU / MXU
    # work across adjacent steps without unbounded code-size growth.
    h_final, _ = jax.lax.fori_loop(0, S, step, (h0, c0), unroll=min(S, 8))

    # FFN: Linear -> ReLU -> (Dropout: id) -> Linear -> ReLU -> (Dropout: id)
    # All widths lane-padded, so both stores/loads are dense.
    h1 = jnp.maximum(
        jnp.dot(h_final, w1_t_ref[...], preferred_element_type=jnp.float32)
        + b1_ref[...], 0.0)                                             # (Bt, HfP)
    y = jnp.maximum(
        jnp.dot(h1, w2_t_ref[...], preferred_element_type=jnp.float32)
        + b2_ref[...], 0.0)                                             # (Bt, OP)
    out_ref[...] = y


def sdf_forward(x, params):
    """x: (B, S, I) float32 -> (1, B, ffn_output_size) float32."""
    B, S, I = x.shape
    H = params["w_hh"].shape[1]
    Hf = params["w1"].shape[0]
    O = params["w2"].shape[0]
    f32 = jnp.float32

    # ---- padded sizes: 8-sublane batch, 128-lane gate / FFN / output ----
    HP = _round_up(H, 128)          # lane-align each gate block (keep at 128)
    G = 4 * HP
    HfP = _round_up(Hf, 128)
    OP = _round_up(O, 128)
    B_pad = _round_up(B, 8)
    B_TILE = min(B_pad, 128)        # batch tile sharded across the grid
    B_pad = _round_up(B_pad, B_TILE)
    nb = B_pad // B_TILE

    # ---- wrapper-side layout plumbing (zero-padded, PyTorch gate order i,f,g,o) ----
    def pad_gate_rows(w):           # (4H, K) -> (4*HP, K)
        K = w.shape[1]
        w4 = w.reshape(4, H, K)
        return jnp.zeros((4, HP, K), f32).at[:, :H, :].set(w4).reshape(4 * HP, K)

    w_ih_t = pad_gate_rows(params["w_ih"]).T                            # (I, G)
    w_hh_t = jnp.zeros((HP, G), f32).at[:H, :].set(
        pad_gate_rows(params["w_hh"]).T)                                # (HP, G)
    b_lstm = jnp.zeros((4, HP), f32).at[:, :H].set(
        (params["b_ih"] + params["b_hh"]).reshape(4, H)).reshape(1, G)  # (1, G)
    w1_t = jnp.zeros((HP, HfP), f32).at[:H, :Hf].set(params["w1"].T)    # (HP, HfP)
    b1 = jnp.zeros((1, HfP), f32).at[0, :Hf].set(params["b1"])          # (1, HfP)
    w2_t = jnp.zeros((HfP, OP), f32).at[:Hf, :O].set(params["w2"].T)    # (HfP, OP)
    b2 = jnp.zeros((1, OP), f32).at[0, :O].set(params["b2"])            # (1, OP)

    # time-major, zero-padded batch rows (padded rows are sliced off below)
    x_tm = jnp.zeros((S, B_pad, I), f32).at[:, :B, :].set(
        jnp.transpose(x, (1, 0, 2)))                                    # (S, B_pad, I)

    const = lambda b: (0, 0)        # weights stay VMEM-resident across tiles

    out = pl.pallas_call(
        sdf_kernel,
        out_shape=jax.ShapeDtypeStruct((B_pad, OP), f32),
        grid_spec=pltpu.PrefetchScalarGridSpec(
            num_scalar_prefetch=0,
            grid=(nb,),
            in_specs=[
                pl.BlockSpec((S, B_TILE, I), lambda b: (0, b, 0)),
                pl.BlockSpec((I, G), const),
                pl.BlockSpec((HP, G), const),
                pl.BlockSpec((1, G), const),
                pl.BlockSpec((HP, HfP), const),
                pl.BlockSpec((1, HfP), const),
                pl.BlockSpec((HfP, OP), const),
                pl.BlockSpec((1, OP), const),
            ],
            out_specs=pl.BlockSpec((B_TILE, OP), lambda b: (b, 0)),
            scratch_shapes=[pltpu.VMEM((S, B_TILE, G), f32)],
        ),
        # TODO(synk): for very large S * B_TILE, re-budget the gx scratch
        # against v7x's 64 MiB VMEM and raise vmem_limit_bytes if needed.
        compiler_params=pltpu.CompilerParams(
            dimension_semantics=("parallel",)),
    )(x_tm, w_ih_t, w_hh_t, b_lstm, w1_t, b1, w2_t, b2)

    return out[:B, :O].reshape(1, B, O)


# ----------------------------------------------------------------------------
# Pure-JAX reference (same math) for a correctness check.
# ----------------------------------------------------------------------------
def sdf_reference(x, params):
    B, S, I = x.shape
    H = params["w_hh"].shape[1]
    h = jnp.zeros((B, H), jnp.float32)
    c = jnp.zeros((B, H), jnp.float32)
    b = params["b_ih"] + params["b_hh"]
    for t in range(S):
        gates = x[:, t, :] @ params["w_ih"].T + h @ params["w_hh"].T + b
        i_g = jax.nn.sigmoid(gates[:, 0 * H:1 * H])
        f_g = jax.nn.sigmoid(gates[:, 1 * H:2 * H])
        g_g = jnp.tanh(gates[:, 2 * H:3 * H])
        o_g = jax.nn.sigmoid(gates[:, 3 * H:4 * H])
        c = f_g * c + i_g * g_g
        h = o_g * jnp.tanh(c)
    h1 = jnp.maximum(h @ params["w1"].T + params["b1"], 0.0)
    y = jnp.maximum(h1 @ params["w2"].T + params["b2"], 0.0)
    return y.reshape(1, B, -1)


def init_params(key, cfg):
    I = cfg["input_size"]
    H = cfg["rnn_hidden_size"]
    Hf = cfg["ffn_hidden_size"]
    O = cfg["ffn_output_size"]
    ks = jax.random.split(key, 8)
    k_lstm = 1.0 / jnp.sqrt(H)

    def u(k, shape, bound):
        return jax.random.uniform(k, shape, jnp.float32, -bound, bound)

    return {
        "w_ih": u(ks[0], (4 * H, I), k_lstm),
        "w_hh": u(ks[1], (4 * H, H), k_lstm),
        "b_ih": u(ks[2], (4 * H,), k_lstm),
        "b_hh": u(ks[3], (4 * H,), k_lstm),
        "w1": u(ks[4], (Hf, H), 1.0 / jnp.sqrt(H)),
        "b1": u(ks[5], (Hf,), 1.0 / jnp.sqrt(H)),
        "w2": u(ks[6], (O, Hf), 1.0 / jnp.sqrt(Hf)),
        "b2": u(ks[7], (O,), 1.0 / jnp.sqrt(Hf)),
    }


if __name__ == "__main__":
    cfg = {"input_size": 2, "rnn_hidden_size": 2,
           "ffn_hidden_size": 2, "ffn_output_size": 1}

    key = jax.random.PRNGKey(0)
    k_x, k_p = jax.random.split(key)

    batch, seq_len = 4, 8
    x = jax.random.normal(k_x, (batch, seq_len, cfg["input_size"]), jnp.float32)
    params = init_params(k_p, cfg)

    out = jax.block_until_ready(sdf_forward(x, params))
    ref = sdf_reference(x, params)

    assert out.shape == (1, batch, cfg["ffn_output_size"])
    assert jnp.allclose(out, ref, atol=1e-5, rtol=1e-5), (out, ref)

    print("KERNEL_OK")
</pallas_src>

<mosaic_0001>
module attributes {stable_mosaic.version = 11 : i64} {
  func.func @sdf_kernel(%arg0: i32, %arg1: memref<8x8x2xf32, #tpu.memory_space<vmem>>, %arg2: memref<2x512xf32, #tpu.memory_space<vmem>>, %arg3: memref<128x512xf32, #tpu.memory_space<vmem>>, %arg4: memref<1x512xf32, #tpu.memory_space<vmem>>, %arg5: memref<128x128xf32, #tpu.memory_space<vmem>>, %arg6: memref<1x128xf32, #tpu.memory_space<vmem>>, %arg7: memref<128x128xf32, #tpu.memory_space<vmem>>, %arg8: memref<1x128xf32, #tpu.memory_space<vmem>>, %arg9: memref<8x128xf32, #tpu.memory_space<vmem>>, %arg10: memref<8x8x512xf32, #tpu.memory_space<vmem>>) attributes {dimension_semantics = [#tpu.dimension_semantics<parallel>], iteration_bounds = array<i64: 1>, scalar_prefetch = 0 : i64, scratch_operands = 1 : i64, tpu.core_type = #tpu.core_type<tc>, window_params = [{transform_indices = @transform_0, window_bounds = array<i64: 8, 8, 2>}, {pipeline_mode = #tpu.pipeline_mode<synchronous>, transform_indices = @transform_1, window_bounds = array<i64: 2, 512>}, {pipeline_mode = #tpu.pipeline_mode<synchronous>, transform_indices = @transform_2, window_bounds = array<i64: 128, 512>}, {pipeline_mode = #tpu.pipeline_mode<synchronous>, transform_indices = @transform_3, window_bounds = array<i64: 1, 512>}, {pipeline_mode = #tpu.pipeline_mode<synchronous>, transform_indices = @transform_4, window_bounds = array<i64: 128, 128>}, {pipeline_mode = #tpu.pipeline_mode<synchronous>, transform_indices = @transform_5, window_bounds = array<i64: 1, 128>}, {pipeline_mode = #tpu.pipeline_mode<synchronous>, transform_indices = @transform_6, window_bounds = array<i64: 128, 128>}, {pipeline_mode = #tpu.pipeline_mode<synchronous>, transform_indices = @transform_7, window_bounds = array<i64: 1, 128>}, {transform_indices = @transform_8, window_bounds = array<i64: 8, 128>}]} {
    %c0 = arith.constant 0 : index
    %c0_0 = arith.constant 0 : index
    %c0_1 = arith.constant 0 : index
    %0 = vector.load %arg1[%c0, %c0_0, %c0_1] : memref<8x8x2xf32, #tpu.memory_space<vmem>>, vector<8x8x2xf32>
    %1 = vector.shape_cast %0 : vector<8x8x2xf32> to vector<64x2xf32>
    %c0_2 = arith.constant 0 : index
    %c0_3 = arith.constant 0 : index
    %2 = vector.load %arg2[%c0_2, %c0_3] : memref<2x512xf32, #tpu.memory_space<vmem>>, vector<2x512xf32>
    %cst = arith.constant dense<0.000000e+00> : vector<64x512xf32>
    %3 = tpu.matmul %1, %2, %cst {dimension_numbers = #tpu.dot_dimension_numbers<[1], [0], [0], [1], [0, 0, 1, 1], [], []>} : vector<64x2xf32>, vector<2x512xf32>, vector<64x512xf32> -> vector<64x512xf32>
    %c0_4 = arith.constant 0 : index
    %c0_5 = arith.constant 0 : index
    %4 = vector.load %arg4[%c0_4, %c0_5] : memref<1x512xf32, #tpu.memory_space<vmem>>, vector<1x512xf32>
    %5 = vector.broadcast %4 : vector<1x512xf32> to vector<64x512xf32>
    %6 = arith.addf %3, %5 : vector<64x512xf32>
    %7 = vector.shape_cast %6 : vector<64x512xf32> to vector<8x8x512xf32>
    %c0_6 = arith.constant 0 : index
    %c0_7 = arith.constant 0 : index
    %c0_8 = arith.constant 0 : index
    %8 = vector.load %arg10[%c0_6, %c0_7, %c0_8] : memref<8x8x512xf32, #tpu.memory_space<vmem>>, vector<8x8x512xf32>
    tpu.vector_store %arg10[%c0_6, %c0_7, %c0_8], %7 {strides = array<i32>} : memref<8x8x512xf32, #tpu.memory_space<vmem>>, vector<8x8x512xf32>,
    %cst_9 = arith.constant 0.000000e+00 : f32
    %9 = vector.broadcast %cst_9 : f32 to vector<8x128xf32>
    %cst_10 = arith.constant 0.000000e+00 : f32
    %10 = vector.broadcast %cst_10 : f32 to vector<8x128xf32>
    %c0_i32 = arith.constant 0 : i32
    %11 = arith.index_cast %c0_i32 : i32 to index
    %c0_11 = arith.constant 0 : index
    %c0_12 = arith.constant 0 : index
    %12 = vector.load %arg10[%11, %c0_11, %c0_12] : memref<8x8x512xf32, #tpu.memory_space<vmem>>, vector<1x8x512xf32>
    %13 = vector.shape_cast %12 : vector<1x8x512xf32> to vector<8x512xf32>
    %c0_13 = arith.constant 0 : index
    %c0_14 = arith.constant 0 : index
    %14 = vector.load %arg3[%c0_13, %c0_14] : memref<128x512xf32, #tpu.memory_space<vmem>>, vector<128x512xf32>
    %cst_15 = arith.constant dense<0.000000e+00> : vector<8x512xf32>
    %15 = tpu.matmul %9, %14, %cst_15 {dimension_numbers = #tpu.dot_dimension_numbers<[1], [0], [0], [1], [0, 0, 1, 1], [], []>} : vector<8x128xf32>, vector<128x512xf32>, vector<8x512xf32> -> vector<8x512xf32>
    %16 = arith.addf %13, %15 : vector<8x512xf32>
    %17 = vector.extract_strided_slice %16 {offsets = [0, 0], sizes = [8, 128], strides = [1, 1]} : vector<8x512xf32> to vector<8x128xf32>
    %18 = arith.negf %17 : vector<8x128xf32>
    %19 = math.exp %18 : vector<8x128xf32>
    %cst_16 = arith.constant 1.000000e+00 : f32
    %20 = vector.broadcast %cst_16 : f32 to vector<8x128xf32>
    %21 = arith.addf %20, %19 : vector<8x128xf32>
    %22 = arith.divf %20, %21 : vector<8x128xf32>
    %23 = vector.extract_strided_slice %16 {offsets = [0, 128], sizes = [8, 128], strides = [1, 1]} : vector<8x512xf32> to vector<8x128xf32>
    %24 = arith.negf %23 : vector<8x128xf32>
    %25 = math.exp %24 : vector<8x128xf32>
    %cst_17 = arith.constant 1.000000e+00 : f32
    %26 = vector.broadcast %cst_17 : f32 to vector<8x128xf32>
    %27 = arith.addf %26, %25 : vector<8x128xf32>
    %28 = arith.divf %26, %27 : vector<8x128xf32>
    %29 = vector.extract_strided_slice %16 {offsets = [0, 256], sizes = [8, 128], strides = [1, 1]} : vector<8x512xf32> to vector<8x128xf32>
    %30 = math.tanh %29 : vector<8x128xf32>
    %31 = vector.extract_strided_slice %16 {offsets = [0, 384], sizes = [8, 128], strides = [1, 1]} : vector<8x512xf32> to vector<8x128xf32>
    %32 = arith.negf %31 : vector<8x128xf32>
    %33 = math.exp %32 : vector<8x128xf32>
    %cst_18 = arith.constant 1.000000e+00 : f32
    %34 = vector.broadcast %cst_18 : f32 to vector<8x128xf32>
    %35 = arith.addf %34, %33 : vector<8x128xf32>
    %36 = arith.divf %34, %35 : vector<8x128xf32>
    %37 = arith.mulf %28, %10 : vector<8x128xf32>
    %38 = arith.mulf %22, %30 : vector<8x128xf32>
    %39 = arith.addf %37, %38 : vector<8x128xf32>
    %40 = math.tanh %39 : vector<8x128xf32>
    %41 = arith.mulf %36, %40 : vector<8x128xf32>
    %c1_i32 = arith.constant 1 : i32
    %42 = arith.index_cast %c1_i32 : i32 to index
    %c0_19 = arith.constant 0 : index
    %c0_20 = arith.constant 0 : index
    %43 = vector.load %arg10[%42, %c0_19, %c0_20] : memref<8x8x512xf32, #tpu.memory_space<vmem>>, vector<1x8x512xf32>
    %44 = vector.shape_cast %43 : vector<1x8x512xf32> to vector<8x512xf32>
    %c0_21 = arith.constant 0 : index
    %c0_22 = arith.constant 0 : index
    %45 = vector.load %arg3[%c0_21, %c0_22] : memref<128x512xf32, #tpu.memory_space<vmem>>, vector<128x512xf32>
    %cst_23 = arith.constant dense<0.000000e+00> : vector<8x512xf32>
    %46 = tpu.matmul %41, %45, %cst_23 {dimension_numbers = #tpu.dot_dimension_numbers<[1], [0], [0], [1], [0, 0, 1, 1], [], []>} : vector<8x128xf32>, vector<128x512xf32>, vector<8x512xf32> -> vector<8x512xf32>
    %47 = arith.addf %44, %46 : vector<8x512xf32>
    %48 = vector.extract_strided_slice %47 {offsets = [0, 0], sizes = [8, 128], strides = [1, 1]} : vector<8x512xf32> to vector<8x128xf32>
    %49 = arith.negf %48 : vector<8x128xf32>
    %50 = math.exp %49 : vector<8x128xf32>
    %cst_24 = arith.constant 1.000000e+00 : f32
    %51 = vector.broadcast %cst_24 : f32 to vector<8x128xf32>
    %52 = arith.addf %51, %50 : vector<8x128xf32>
    %53 = arith.divf %51, %52 : vector<8x128xf32>
    %54 = vector.extract_strided_slice %47 {offsets = [0, 128], sizes = [8, 128], strides = [1, 1]} : vector<8x512xf32> to vector<8x128xf32>
    %55 = arith.negf %54 : vector<8x128xf32>
    %56 = math.exp %55 : vector<8x128xf32>
    %cst_25 = arith.constant 1.000000e+00 : f32
    %57 = vector.broadcast %cst_25 : f32 to vector<8x128xf32>
    %58 = arith.addf %57, %56 : vector<8x128xf32>
    %59 = arith.divf %57, %58 : vector<8x128xf32>
    %60 = vector.extract_strided_slice %47 {offsets = [0, 256], sizes = [8, 128], strides = [1, 1]} : vector<8x512xf32> to vector<8x128xf32>
    %61 = math.tanh %60 : vector<8x128xf32>
    %62 = vector.extract_strided_slice %47 {offsets = [0, 384], sizes = [8, 128], strides = [1, 1]} : vector<8x512xf32> to vector<8x128xf32>
    %63 = arith.negf %62 : vector<8x128xf32>
    %64 = math.exp %63 : vector<8x128xf32>
    %cst_26 = arith.constant 1.000000e+00 : f32
    %65 = vector.broadcast %cst_26 : f32 to vector<8x128xf32>
    %66 = arith.addf %65, %64 : vector<8x128xf32>
    %67 = arith.divf %65, %66 : vector<8x128xf32>
    %68 = arith.mulf %59, %39 : vector<8x128xf32>
    %69 = arith.mulf %53, %61 : vector<8x128xf32>
    %70 = arith.addf %68, %69 : vector<8x128xf32>
    %71 = math.tanh %70 : vector<8x128xf32>
    %72 = arith.mulf %67, %71 : vector<8x128xf32>
    %c2_i32 = arith.constant 2 : i32
    %73 = arith.index_cast %c2_i32 : i32 to index
    %c0_27 = arith.constant 0 : index
    %c0_28 = arith.constant 0 : index
    %74 = vector.load %arg10[%73, %c0_27, %c0_28] : memref<8x8x512xf32, #tpu.memory_space<vmem>>, vector<1x8x512xf32>
    %75 = vector.shape_cast %74 : vector<1x8x512xf32> to vector<8x512xf32>
    %c0_29 = arith.constant 0 : index
    %c0_30 = arith.constant 0 : index
    %76 = vector.load %arg3[%c0_29, %c0_30] : memref<128x512xf32, #tpu.memory_space<vmem>>, vector<128x512xf32>
    %cst_31 = arith.constant dense<0.000000e+00> : vector<8x512xf32>
    %77 = tpu.matmul %72, %76, %cst_31 {dimension_numbers = #tpu.dot_dimension_numbers<[1], [0], [0], [1], [0, 0, 1, 1], [], []>} : vector<8x128xf32>, vector<128x512xf32>, vector<8x512xf32> -> vector<8x512xf32>
    %78 = arith.addf %75, %77 : vector<8x512xf32>
    %79 = vector.extract_strided_slice %78 {offsets = [0, 0], sizes = [8, 128], strides = [1, 1]} : vector<8x512xf32> to vector<8x128xf32>
    %80 = arith.negf %79 : vector<8x128xf32>
    %81 = math.exp %80 : vector<8x128xf32>
    %cst_32 = arith.constant 1.000000e+00 : f32
    %82 = vector.broadcast %cst_32 : f32 to vector<8x128xf32>
    %83 = arith.addf %82, %81 : vector<8x128xf32>
    %84 = arith.divf %82, %83 : vector<8x128xf32>
    %85 = vector.extract_strided_slice %78 {offsets = [0, 128], sizes = [8, 128], strides = [1, 1]} : vector<8x512xf32> to vector<8x128xf32>
    %86 = arith.negf %85 : vector<8x128xf32>
    %87 = math.exp %86 : vector<8x128xf32>
    %cst_33 = arith.constant 1.000000e+00 : f32
    %88 = vector.broadcast %cst_33 : f32 to vector<8x128xf32>
    %89 = arith.addf %88, %87 : vector<8x128xf32>
    %90 = arith.divf %88, %89 : vector<8x128xf32>
    %91 = vector.extract_strided_slice %78 {offsets = [0, 256], sizes = [8, 128], strides = [1, 1]} : vector<8x512xf32> to vector<8x128xf32>
    %92 = math.tanh %91 : vector<8x128xf32>
    %93 = vector.extract_strided_slice %78 {offsets = [0, 384], sizes = [8, 128], strides = [1, 1]} : vector<8x512xf32> to vector<8x128xf32>
    %94 = arith.negf %93 : vector<8x128xf32>
    %95 = math.exp %94 : vector<8x128xf32>
    %cst_34 = arith.constant 1.000000e+00 : f32
    %96 = vector.broadcast %cst_34 : f32 to vector<8x128xf32>
    %97 = arith.addf %96, %95 : vector<8x128xf32>
    %98 = arith.divf %96, %97 : vector<8x128xf32>
    %99 = arith.mulf %90, %70 : vector<8x128xf32>
    %100 = arith.mulf %84, %92 : vector<8x128xf32>
    %101 = arith.addf %99, %100 : vector<8x128xf32>
    %102 = math.tanh %101 : vector<8x128xf32>
    %103 = arith.mulf %98, %102 : vector<8x128xf32>
    %c3_i32 = arith.constant 3 : i32
    %104 = arith.index_cast %c3_i32 : i32 to index
    %c0_35 = arith.constant 0 : index
    %c0_36 = arith.constant 0 : index
    %105 = vector.load %arg10[%104, %c0_35, %c0_36] : memref<8x8x512xf32, #tpu.memory_space<vmem>>, vector<1x8x512xf32>
    %106 = vector.shape_cast %105 : vector<1x8x512xf32> to vector<8x512xf32>
    %c0_37 = arith.constant 0 : index
    %c0_38 = arith.constant 0 : index
    %107 = vector.load %arg3[%c0_37, %c0_38] : memref<128x512xf32, #tpu.memory_space<vmem>>, vector<128x512xf32>
    %cst_39 = arith.constant dense<0.000000e+00> : vector<8x512xf32>
    %108 = tpu.matmul %103, %107, %cst_39 {dimension_numbers = #tpu.dot_dimension_numbers<[1], [0], [0], [1], [0, 0, 1, 1], [], []>} : vector<8x128xf32>, vector<128x512xf32>, vector<8x512xf32> -> vector<8x512xf32>
    %109 = arith.addf %106, %108 : vector<8x512xf32>
    %110 = vector.extract_strided_slice %109 {offsets = [0, 0], sizes = [8, 128], strides = [1, 1]} : vector<8x512xf32> to vector<8x128xf32>
    %111 = arith.negf %110 : vector<8x128xf32>
    %112 = math.exp %111 : vector<8x128xf32>
    %cst_40 = arith.constant 1.000000e+00 : f32
    %113 = vector.broadcast %cst_40 : f32 to vector<8x128xf32>
    %114 = arith.addf %113, %112 : vector<8x128xf32>
    %115 = arith.divf %113, %114 : vector<8x128xf32>
    %116 = vector.extract_strided_slice %109 {offsets = [0, 128], sizes = [8, 128], strides = [1, 1]} : vector<8x512xf32> to vector<8x128xf32>
    %117 = arith.negf %116 : vector<8x128xf32>
    %118 = math.exp %117 : vector<8x128xf32>
    %cst_41 = arith.constant 1.000000e+00 : f32
    %119 = vector.broadcast %cst_41 : f32 to vector<8x128xf32>
    %120 = arith.addf %119, %118 : vector<8x128xf32>
    %121 = arith.divf %119, %120 : vector<8x128xf32>
    %122 = vector.extract_strided_slice %109 {offsets = [0, 256], sizes = [8, 128], strides = [1, 1]} : vector<8x512xf32> to vector<8x128xf32>
    %123 = math.tanh %122 : vector<8x128xf32>
    %124 = vector.extract_strided_slice %109 {offsets = [0, 384], sizes = [8, 128], strides = [1, 1]} : vector<8x512xf32> to vector<8x128xf32>
    %125 = arith.negf %124 : vector<8x128xf32>
    %126 = math.exp %125 : vector<8x128xf32>
    %cst_42 = arith.constant 1.000000e+00 : f32
    %127 = vector.broadcast %cst_42 : f32 to vector<8x128xf32>
    %128 = arith.addf %127, %126 : vector<8x128xf32>
    %129 = arith.divf %127, %128 : vector<8x128xf32>
    %130 = arith.mulf %121, %101 : vector<8x128xf32>
    %131 = arith.mulf %115, %123 : vector<8x128xf32>
    %132 = arith.addf %130, %131 : vector<8x128xf32>
    %133 = math.tanh %132 : vector<8x128xf32>
    %134 = arith.mulf %129, %133 : vector<8x128xf32>
    %c4_i32 = arith.constant 4 : i32
    %135 = arith.index_cast %c4_i32 : i32 to index
    %c0_43 = arith.constant 0 : index
    %c0_44 = arith.constant 0 : index
    %136 = vector.load %arg10[%135, %c0_43, %c0_44] : memref<8x8x512xf32, #tpu.memory_space<vmem>>, vector<1x8x512xf32>
    %137 = vector.shape_cast %136 : vector<1x8x512xf32> to vector<8x512xf32>
    %c0_45 = arith.constant 0 : index
    %c0_46 = arith.constant 0 : index
    %138 = vector.load %arg3[%c0_45, %c0_46] : memref<128x512xf32, #tpu.memory_space<vmem>>, vector<128x512xf32>
    %cst_47 = arith.constant dense<0.000000e+00> : vector<8x512xf32>
    %139 = tpu.matmul %134, %138, %cst_47 {dimension_numbers = #tpu.dot_dimension_numbers<[1], [0], [0], [1], [0, 0, 1, 1], [], []>} : vector<8x128xf32>, vector<128x512xf32>, vector<8x512xf32> -> vector<8x512xf32>
    %140 = arith.addf %137, %139 : vector<8x512xf32>
    %141 = vector.extract_strided_slice %140 {offsets = [0, 0], sizes = [8, 128], strides = [1, 1]} : vector<8x512xf32> to vector<8x128xf32>
    %142 = arith.negf %141 : vector<8x128xf32>
    %143 = math.exp %142 : vector<8x128xf32>
    %cst_48 = arith.constant 1.000000e+00 : f32
    %144 = vector.broadcast %cst_48 : f32 to vector<8x128xf32>
    %145 = arith.addf %144, %143 : vector<8x128xf32>
    %146 = arith.divf %144, %145 : vector<8x128xf32>
    %147 = vector.extract_strided_slice %140 {offsets = [0, 128], sizes = [8, 128], strides = [1, 1]} : vector<8x512xf32> to vector<8x128xf32>
    %148 = arith.negf %147 : vector<8x128xf32>
    %149 = math.exp %148 : vector<8x128xf32>
    %cst_49 = arith.constant 1.000000e+00 : f32
    %150 = vector.broadcast %cst_49 : f32 to vector<8x128xf32>
    %151 = arith.addf %150, %149 : vector<8x128xf32>
    %152 = arith.divf %150, %151 : vector<8x128xf32>
    %153 = vector.extract_strided_slice %140 {offsets = [0, 256], sizes = [8, 128], strides = [1, 1]} : vector<8x512xf32> to vector<8x128xf32>
    %154 = math.tanh %153 : vector<8x128xf32>
    %155 = vector.extract_strided_slice %140 {offsets = [0, 384], sizes = [8, 128], strides = [1, 1]} : vector<8x512xf32> to vector<8x128xf32>
    %156 = arith.negf %155 : vector<8x128xf32>
    %157 = math.exp %156 : vector<8x128xf32>
    %cst_50 = arith.constant 1.000000e+00 : f32
    %158 = vector.broadcast %cst_50 : f32 to vector<8x128xf32>
    %159 = arith.addf %158, %157 : vector<8x128xf32>
    %160 = arith.divf %158, %159 : vector<8x128xf32>
    %161 = arith.mulf %152, %132 : vector<8x128xf32>
    %162 = arith.mulf %146, %154 : vector<8x128xf32>
    %163 = arith.addf %161, %162 : vector<8x128xf32>
    %164 = math.tanh %163 : vector<8x128xf32>
    %165 = arith.mulf %160, %164 : vector<8x128xf32>
    %c5_i32 = arith.constant 5 : i32
    %166 = arith.index_cast %c5_i32 : i32 to index
    %c0_51 = arith.constant 0 : index
    %c0_52 = arith.constant 0 : index
    %167 = vector.load %arg10[%166, %c0_51, %c0_52] : memref<8x8x512xf32, #tpu.memory_space<vmem>>, vector<1x8x512xf32>
    %168 = vector.shape_cast %167 : vector<1x8x512xf32> to vector<8x512xf32>
    %c0_53 = arith.constant 0 : index
    %c0_54 = arith.constant 0 : index
    %169 = vector.load %arg3[%c0_53, %c0_54] : memref<128x512xf32, #tpu.memory_space<vmem>>, vector<128x512xf32>
    %cst_55 = arith.constant dense<0.000000e+00> : vector<8x512xf32>
    %170 = tpu.matmul %165, %169, %cst_55 {dimension_numbers = #tpu.dot_dimension_numbers<[1], [0], [0], [1], [0, 0, 1, 1], [], []>} : vector<8x128xf32>, vector<128x512xf32>, vector<8x512xf32> -> vector<8x512xf32>
    %171 = arith.addf %168, %170 : vector<8x512xf32>
    %172 = vector.extract_strided_slice %171 {offsets = [0, 0], sizes = [8, 128], strides = [1, 1]} : vector<8x512xf32> to vector<8x128xf32>
    %173 = arith.negf %172 : vector<8x128xf32>
    %174 = math.exp %173 : vector<8x128xf32>
    %cst_56 = arith.constant 1.000000e+00 : f32
    %175 = vector.broadcast %cst_56 : f32 to vector<8x128xf32>
    %176 = arith.addf %175, %174 : vector<8x128xf32>
    %177 = arith.divf %175, %176 : vector<8x128xf32>
    %178 = vector.extract_strided_slice %171 {offsets = [0, 128], sizes = [8, 128], strides = [1, 1]} : vector<8x512xf32> to vector<8x128xf32>
    %179 = arith.negf %178 : vector<8x128xf32>
    %180 = math.exp %179 : vector<8x128xf32>
    %cst_57 = arith.constant 1.000000e+00 : f32
    %181 = vector.broadcast %cst_57 : f32 to vector<8x128xf32>
    %182 = arith.addf %181, %180 : vector<8x128xf32>
    %183 = arith.divf %181, %182 : vector<8x128xf32>
    %184 = vector.extract_strided_slice %171 {offsets = [0, 256], sizes = [8, 128], strides = [1, 1]} : vector<8x512xf32> to vector<8x128xf32>
    %185 = math.tanh %184 : vector<8x128xf32>
    %186 = vector.extract_strided_slice %171 {offsets = [0, 384], sizes = [8, 128], strides = [1, 1]} : vector<8x512xf32> to vector<8x128xf32>
    %187 = arith.negf %186 : vector<8x128xf32>
    %188 = math.exp %187 : vector<8x128xf32>
    %cst_58 = arith.constant 1.000000e+00 : f32
    %189 = vector.broadcast %cst_58 : f32 to vector<8x128xf32>
    %190 = arith.addf %189, %188 : vector<8x128xf32>
    %191 = arith.divf %189, %190 : vector<8x128xf32>
    %192 = arith.mulf %183, %163 : vector<8x128xf32>
    %193 = arith.mulf %177, %185 : vector<8x128xf32>
    %194 = arith.addf %192, %193 : vector<8x128xf32>
    %195 = math.tanh %194 : vector<8x128xf32>
    %196 = arith.mulf %191, %195 : vector<8x128xf32>
    %c6_i32 = arith.constant 6 : i32
    %197 = arith.index_cast %c6_i32 : i32 to index
    %c0_59 = arith.constant 0 : index
    %c0_60 = arith.constant 0 : index
    %198 = vector.load %arg10[%197, %c0_59, %c0_60] : memref<8x8x512xf32, #tpu.memory_space<vmem>>, vector<1x8x512xf32>
    %199 = vector.shape_cast %198 : vector<1x8x512xf32> to vector<8x512xf32>
    %c0_61 = arith.constant 0 : index
    %c0_62 = arith.constant 0 : index
    %200 = vector.load %arg3[%c0_61, %c0_62] : memref<128x512xf32, #tpu.memory_space<vmem>>, vector<128x512xf32>
    %cst_63 = arith.constant dense<0.000000e+00> : vector<8x512xf32>
    %201 = tpu.matmul %196, %200, %cst_63 {dimension_numbers = #tpu.dot_dimension_numbers<[1], [0], [0], [1], [0, 0, 1, 1], [], []>} : vector<8x128xf32>, vector<128x512xf32>, vector<8x512xf32> -> vector<8x512xf32>
    %202 = arith.addf %199, %201 : vector<8x512xf32>
    %203 = vector.extract_strided_slice %202 {offsets = [0, 0], sizes = [8, 128], strides = [1, 1]} : vector<8x512xf32> to vector<8x128xf32>
    %204 = arith.negf %203 : vector<8x128xf32>
    %205 = math.exp %204 : vector<8x128xf32>
    %cst_64 = arith.constant 1.000000e+00 : f32
    %206 = vector.broadcast %cst_64 : f32 to vector<8x128xf32>
    %207 = arith.addf %206, %205 : vector<8x128xf32>
    %208 = arith.divf %206, %207 : vector<8x128xf32>
    %209 = vector.extract_strided_slice %202 {offsets = [0, 128], sizes = [8, 128], strides = [1, 1]} : vector<8x512xf32> to vector<8x128xf32>
    %210 = arith.negf %209 : vector<8x128xf32>
    %211 = math.exp %210 : vector<8x128xf32>
    %cst_65 = arith.constant 1.000000e+00 : f32
    %212 = vector.broadcast %cst_65 : f32 to vector<8x128xf32>
    %213 = arith.addf %212, %211 : vector<8x128xf32>
    %214 = arith.divf %212, %213 : vector<8x128xf32>
    %215 = vector.extract_strided_slice %202 {offsets = [0, 256], sizes = [8, 128], strides = [1, 1]} : vector<8x512xf32> to vector<8x128xf32>
    %216 = math.tanh %215 : vector<8x128xf32>
    %217 = vector.extract_strided_slice %202 {offsets = [0, 384], sizes = [8, 128], strides = [1, 1]} : vector<8x512xf32> to vector<8x128xf32>
    %218 = arith.negf %217 : vector<8x128xf32>
    %219 = math.exp %218 : vector<8x128xf32>
    %cst_66 = arith.constant 1.000000e+00 : f32
    %220 = vector.broadcast %cst_66 : f32 to vector<8x128xf32>
    %221 = arith.addf %220, %219 : vector<8x128xf32>
    %222 = arith.divf %220, %221 : vector<8x128xf32>
    %223 = arith.mulf %214, %194 : vector<8x128xf32>
    %224 = arith.mulf %208, %216 : vector<8x128xf32>
    %225 = arith.addf %223, %224 : vector<8x128xf32>
    %226 = math.tanh %225 : vector<8x128xf32>
    %227 = arith.mulf %222, %226 : vector<8x128xf32>
    %c7_i32 = arith.constant 7 : i32
    %228 = arith.index_cast %c7_i32 : i32 to index
    %c0_67 = arith.constant 0 : index
    %c0_68 = arith.constant 0 : index
    %229 = vector.load %arg10[%228, %c0_67, %c0_68] : memref<8x8x512xf32, #tpu.memory_space<vmem>>, vector<1x8x512xf32>
    %230 = vector.shape_cast %229 : vector<1x8x512xf32> to vector<8x512xf32>
    %c0_69 = arith.constant 0 : index
    %c0_70 = arith.constant 0 : index
    %231 = vector.load %arg3[%c0_69, %c0_70] : memref<128x512xf32, #tpu.memory_space<vmem>>, vector<128x512xf32>
    %cst_71 = arith.constant dense<0.000000e+00> : vector<8x512xf32>
    %232 = tpu.matmul %227, %231, %cst_71 {dimension_numbers = #tpu.dot_dimension_numbers<[1], [0], [0], [1], [0, 0, 1, 1], [], []>} : vector<8x128xf32>, vector<128x512xf32>, vector<8x512xf32> -> vector<8x512xf32>
    %233 = arith.addf %230, %232 : vector<8x512xf32>
    %234 = vector.extract_strided_slice %233 {offsets = [0, 0], sizes = [8, 128], strides = [1, 1]} : vector<8x512xf32> to vector<8x128xf32>
    %235 = arith.negf %234 : vector<8x128xf32>
    %236 = math.exp %235 : vector<8x128xf32>
    %cst_72 = arith.constant 1.000000e+00 : f32
    %237 = vector.broadcast %cst_72 : f32 to vector<8x128xf32>
    %238 = arith.addf %237, %236 : vector<8x128xf32>
    %239 = arith.divf %237, %238 : vector<8x128xf32>
    %240 = vector.extract_strided_slice %233 {offsets = [0, 128], sizes = [8, 128], strides = [1, 1]} : vector<8x512xf32> to vector<8x128xf32>
    %241 = arith.negf %240 : vector<8x128xf32>
    %242 = math.exp %241 : vector<8x128xf32>
    %cst_73 = arith.constant 1.000000e+00 : f32
    %243 = vector.broadcast %cst_73 : f32 to vector<8x128xf32>
    %244 = arith.addf %243, %242 : vector<8x128xf32>
    %245 = arith.divf %243, %244 : vector<8x128xf32>
    %246 = vector.extract_strided_slice %233 {offsets = [0, 256], sizes = [8, 128], strides = [1, 1]} : vector<8x512xf32> to vector<8x128xf32>
    %247 = math.tanh %246 : vector<8x128xf32>
    %248 = vector.extract_strided_slice %233 {offsets = [0, 384], sizes = [8, 128], strides = [1, 1]} : vector<8x512xf32> to vector<8x128xf32>
    %249 = arith.negf %248 : vector<8x128xf32>
    %250 = math.exp %249 : vector<8x128xf32>
    %cst_74 = arith.constant 1.000000e+00 : f32
    %251 = vector.broadcast %cst_74 : f32 to vector<8x128xf32>
    %252 = arith.addf %251, %250 : vector<8x128xf32>
    %253 = arith.divf %251, %252 : vector<8x128xf32>
    %254 = arith.mulf %245, %225 : vector<8x128xf32>
    %255 = arith.mulf %239, %247 : vector<8x128xf32>
    %256 = arith.addf %254, %255 : vector<8x128xf32>
    %257 = math.tanh %256 : vector<8x128xf32>
    %258 = arith.mulf %253, %257 : vector<8x128xf32>
    %c8_i32 = arith.constant 8 : i32
    %c0_75 = arith.constant 0 : index
    %c0_76 = arith.constant 0 : index
    %259 = vector.load %arg5[%c0_75, %c0_76] : memref<128x128xf32, #tpu.memory_space<vmem>>, vector<128x128xf32>
    %cst_77 = arith.constant dense<0.000000e+00> : vector<8x128xf32>
    %260 = tpu.matmul %258, %259, %cst_77 {dimension_numbers = #tpu.dot_dimension_numbers<[1], [0], [0], [1], [0, 0, 1, 1], [], []>} : vector<8x128xf32>, vector<128x128xf32>, vector<8x128xf32> -> vector<8x128xf32>
    %c0_78 = arith.constant 0 : index
    %c0_79 = arith.constant 0 : index
    %261 = vector.load %arg6[%c0_78, %c0_79] : memref<1x128xf32, #tpu.memory_space<vmem>>, vector<1x128xf32>
    %262 = vector.broadcast %261 : vector<1x128xf32> to vector<8x128xf32>
    %263 = arith.addf %260, %262 : vector<8x128xf32>
    %cst_80 = arith.constant 0.000000e+00 : f32
    %264 = vector.broadcast %cst_80 : f32 to vector<8x128xf32>
    %265 = arith.maximumf %263, %264 : vector<8x128xf32>
    %c0_81 = arith.constant 0 : index
    %c0_82 = arith.constant 0 : index
    %266 = vector.load %arg7[%c0_81, %c0_82] : memref<128x128xf32, #tpu.memory_space<vmem>>, vector<128x128xf32>
    %cst_83 = arith.constant dense<0.000000e+00> : vector<8x128xf32>
    %267 = tpu.matmul %265, %266, %cst_83 {dimension_numbers = #tpu.dot_dimension_numbers<[1], [0], [0], [1], [0, 0, 1, 1], [], []>} : vector<8x128xf32>, vector<128x128xf32>, vector<8x128xf32> -> vector<8x128xf32>
    %c0_84 = arith.constant 0 : index
    %c0_85 = arith.constant 0 : index
    %268 = vector.load %arg8[%c0_84, %c0_85] : memref<1x128xf32, #tpu.memory_space<vmem>>, vector<1x128xf32>
    %269 = vector.broadcast %268 : vector<1x128xf32> to vector<8x128xf32>
    %270 = arith.addf %267, %269 : vector<8x128xf32>
    %cst_86 = arith.constant 0.000000e+00 : f32
    %271 = vector.broadcast %cst_86 : f32 to vector<8x128xf32>
    %272 = arith.maximumf %270, %271 : vector<8x128xf32>
    %c0_87 = arith.constant 0 : index
    %c0_88 = arith.constant 0 : index
    %273 = vector.load %arg9[%c0_87, %c0_88] : memref<8x128xf32, #tpu.memory_space<vmem>>, vector<8x128xf32>
    tpu.vector_store %arg9[%c0_87, %c0_88], %272 {strides = array<i32>} : memref<8x128xf32, #tpu.memory_space<vmem>>, vector<8x128xf32>,
    return
  }
  func.func @transform_0(%arg0: i32) -> (i32, i32, i32) {
    %c0_i32 = arith.constant 0 : i32
    %c0_i32_0 = arith.constant 0 : i32
    %c0_i32_1 = arith.constant 0 : i32
    return %c0_i32, %arg0, %c0_i32_0 : i32, i32, i32
  }
  func.func @transform_1(%arg0: i32) -> (i32, i32) {
    %c0_i32 = arith.constant 0 : i32
    %c0_i32_0 = arith.constant 0 : i32
    %c0_i32_1 = arith.constant 0 : i32
    return %c0_i32, %c0_i32_0 : i32, i32
  }
  func.func @transform_2(%arg0: i32) -> (i32, i32) {
    %c0_i32 = arith.constant 0 : i32
    %c0_i32_0 = arith.constant 0 : i32
    %c0_i32_1 = arith.constant 0 : i32
    return %c0_i32, %c0_i32_0 : i32, i32
  }
  func.func @transform_3(%arg0: i32) -> (i32, i32) {
    %c0_i32 = arith.constant 0 : i32
    %c0_i32_0 = arith.constant 0 : i32
    %c0_i32_1 = arith.constant 0 : i32
    return %c0_i32, %c0_i32_0 : i32, i32
  }
  func.func @transform_4(%arg0: i32) -> (i32, i32) {
    %c0_i32 = arith.constant 0 : i32
    %c0_i32_0 = arith.constant 0 : i32
    %c0_i32_1 = arith.constant 0 : i32
    return %c0_i32, %c0_i32_0 : i32, i32
  }
  func.func @transform_5(%arg0: i32) -> (i32, i32) {
    %c0_i32 = arith.constant 0 : i32
    %c0_i32_0 = arith.constant 0 : i32
    %c0_i32_1 = arith.constant 0 : i32
    return %c0_i32, %c0_i32_0 : i32, i32
  }
  func.func @transform_6(%arg0: i32) -> (i32, i32) {
    %c0_i32 = arith.constant 0 : i32
    %c0_i32_0 = arith.constant 0 : i32
    %c0_i32_1 = arith.constant 0 : i32
    return %c0_i32, %c0_i32_0 : i32, i32
  }
  func.func @transform_7(%arg0: i32) -> (i32, i32) {
    %c0_i32 = arith.constant 0 : i32
    %c0_i32_0 = arith.constant 0 : i32
    %c0_i32_1 = arith.constant 0 : i32
    return %c0_i32, %c0_i32_0 : i32, i32
  }
  func.func @transform_8(%arg0: i32) -> (i32, i32) {
    %c0_i32 = arith.constant 0 : i32
    %c0_i32_0 = arith.constant 0 : i32
    return %arg0, %c0_i32 : i32, i32
  }
}

</mosaic_0001>

<llo_original>
// kernel: tpu_custom_call.1
$region0: #{tpu_custom_call.1}
  #allocation0 [shape = 'u32[]', space=smem, size = 0x4, offset = 0x4, fixed_abs, tag = 'smem constant byte address 0x4 - core index']
  #allocation1 [shape = 'u32[144,128]{1,0:T(1,128)}', space=vmem, size = 0x12000, scoped, tag = 'internal scratch']
  #allocation2 [shape = 'f32[8,8,512]{2,1,0:T(8,128)}', space=vmem, size = 0x20000, scoped, tag = 'scratch operand']
  %s0 = inlined_call_operand.vmem [shape: f32[8,8,2], index: 0, kind: input, shape index: {}]
  %s1 = inlined_call_operand.vmem [shape: f32[2,512], index: 1, kind: input, shape index: {}]
  %s2 = inlined_call_operand.hbm [shape: f32[128,512], index: 2, kind: input, shape index: {}]
  %s3 = inlined_call_operand.vmem [shape: f32[1,512], index: 3, kind: input, shape index: {}]
  %s4 = inlined_call_operand.hbm [shape: f32[128,128], index: 4, kind: input, shape index: {}]
  %s5 = inlined_call_operand.vmem [shape: f32[1,128], index: 5, kind: input, shape index: {}]
  %s6 = inlined_call_operand.hbm [shape: f32[128,128], index: 6, kind: input, shape index: {}]
  %s7 = inlined_call_operand.vmem [shape: f32[1,128], index: 7, kind: input, shape index: {}]
  %s8 = inlined_call_operand.hbm [shape: f32[8,128], index: 8, kind: output, shape index: {}]
  %s9 = sld [smem:[#allocation0]]
  $region54: #{tpu_custom_call.1} parent=0
    _
  %s11 = ssub.s32 1, %s9
  %s12 = scalar_select 0, %s11, %s9
  $region1: #{tpu_custom_call.1} parent=0
    #allocation3 [shape = 'u8[262144]{0}', space=vmem, size = 0x40000, scoped, tag = 'input window, operand 2, single buffered']
    #allocation4 [shape = 's32[1]{0}', space=sflag, size = 0x4, scoped, tag = 'scoped memory for tpu_custom_call.1']
    #allocation5 [shape = 's32[1]{0}', space=sflag, size = 0x4, scoped, tag = 'scoped memory for tpu_custom_call.1']
    #allocation6 [shape = 'u8[65536]{0}', space=vmem, size = 0x10000, scoped, tag = 'input window, operand 4, single buffered']
    #allocation7 [shape = 's32[1]{0}', space=sflag, size = 0x4, scoped, tag = 'scoped memory for tpu_custom_call.1']
    #allocation8 [shape = 'u8[65536]{0}', space=vmem, size = 0x10000, scoped, tag = 'input window, operand 6, single buffered']
    #allocation9 [shape = 'u8[4096]{0}', space=vmem, size = 0x1000, scoped, tag = 'output window, operand 0, single buffered']
    %13 = vsyncpa [#allocation4], 0
    %14 = vsyncpa [#allocation7], 0
    %15 = vsyncpa [#allocation5], 0
    // Predicated region
    $region2: #{tpu_custom_call.1} parent=1 // pred_check
      _
    $region3: #{tpu_custom_call.1} parent=1 // pred_check_branch
      %17 = sbr.rel (0) target = $region5
    $region4: #{tpu_custom_call.1} parent=1 // pred_region
      _
    $region5: #{tpu_custom_call.1} parent=1 // pred_fallthru
      _
    // Predicated region
    $region6: #{tpu_custom_call.1} parent=1 // pred_check
      _
    $region7: #{tpu_custom_call.1} parent=1 // pred_check_branch
      %19 = sbr.rel (0) target = $region9
    $region8: #{tpu_custom_call.1} parent=1 // pred_region
      _
    $region9: #{tpu_custom_call.1} parent=1 // pred_fallthru
      _
    // Predicated region
    $region10: #{tpu_custom_call.1} parent=1 // pred_check
      _
    $region11: #{tpu_custom_call.1} parent=1 // pred_check_branch
      %21 = sbr.rel (0) target = $region13
    $region12: #{tpu_custom_call.1} parent=1 // pred_region
      %s23 = ssub.s32 8192, 8192
      %24 = vsyncadd [#allocation4], %s23
      %s25 = sshll.u32 [#allocation3], 4
      %s26 = int_to_ptr.vmem [resolvable:$true] %s25
      %31 = dma.hbm_to_vmem [thread:$0]  %s2, 8192, %s26, [#allocation4], 512, 512, 32
    $region13: #{tpu_custom_call.1} parent=1 // pred_fallthru
      _
    // Predicated region
    $region14: #{tpu_custom_call.1} parent=1 // pred_check
      _
    $region15: #{tpu_custom_call.1} parent=1 // pred_check_branch
      %33 = sbr.rel (0) target = $region17
    $region16: #{tpu_custom_call.1} parent=1 // pred_region
      _
    $region17: #{tpu_custom_call.1} parent=1 // pred_fallthru
      _
    // Predicated region
    $region18: #{tpu_custom_call.1} parent=1 // pred_check
      _
    $region19: #{tpu_custom_call.1} parent=1 // pred_check_branch
      %35 = sbr.rel (0) target = $region21
    $region20: #{tpu_custom_call.1} parent=1 // pred_region
      %s37 = ssub.s32 2048, 2048
      %38 = vsyncadd [#allocation7], %s37
      %s39 = sshll.u32 [#allocation6], 4
      %s40 = int_to_ptr.vmem [resolvable:$true] %s39
      %45 = dma.hbm_to_vmem [thread:$0]  %s4, 2048, %s40, [#allocation7], 128, 128, 8
    $region21: #{tpu_custom_call.1} parent=1 // pred_fallthru
      _
    // Predicated region
    $region22: #{tpu_custom_call.1} parent=1 // pred_check
      _
    $region23: #{tpu_custom_call.1} parent=1 // pred_check_branch
      %47 = sbr.rel (0) target = $region25
    $region24: #{tpu_custom_call.1} parent=1 // pred_region
      _
    $region25: #{tpu_custom_call.1} parent=1 // pred_fallthru
      _
    // Predicated region
    $region26: #{tpu_custom_call.1} parent=1 // pred_check
      _
    $region27: #{tpu_custom_call.1} parent=1 // pred_check_branch
      %49 = sbr.rel (0) target = $region29
    $region28: #{tpu_custom_call.1} parent=1 // pred_region
      %s51 = ssub.s32 2048, 2048
      %52 = vsyncadd [#allocation7], %s51
      %s53 = sshll.u32 [#allocation8], 4
      %s54 = int_to_ptr.vmem [resolvable:$true] %s53
      %59 = dma.hbm_to_vmem [thread:$0]  %s6, 2048, %s54, [#allocation7], 128, 128, 8
    $region29: #{tpu_custom_call.1} parent=1 // pred_fallthru
      _
    // Predicated region
    $region30: #{tpu_custom_call.1} parent=1 // pred_check
      _
    $region31: #{tpu_custom_call.1} parent=1 // pred_check_branch
      %61 = sbr.rel (0) target = $region33
    $region32: #{tpu_custom_call.1} parent=1 // pred_region
      _
    $region33: #{tpu_custom_call.1} parent=1 // pred_fallthru
      _
    // Predicated region
    $region34: #{tpu_custom_call.1} parent=1 // pred_check
      _
    $region35: #{tpu_custom_call.1} parent=1 // pred_check_branch
      %63 = sbr.rel (0) target = $region37
    $region36: #{tpu_custom_call.1} parent=1 // pred_region
      %64 = dma.done [#allocation4], 8192
    $region37: #{tpu_custom_call.1} parent=1 // pred_fallthru
      _
    // Predicated region
    $region38: #{tpu_custom_call.1} parent=1 // pred_check
      _
    $region39: #{tpu_custom_call.1} parent=1 // pred_check_branch
      %66 = sbr.rel (0) target = $region41
    $region40: #{tpu_custom_call.1} parent=1 // pred_region
      %67 = dma.done [#allocation7], 2048
    $region41: #{tpu_custom_call.1} parent=1 // pred_fallthru
      _
    // Predicated region
    $region42: #{tpu_custom_call.1} parent=1 // pred_check
      _
    $region43: #{tpu_custom_call.1} parent=1 // pred_check_branch
      %69 = sbr.rel (0) target = $region45
    $region44: #{tpu_custom_call.1} parent=1 // pred_region
      %70 = dma.done [#allocation7], 2048
    $region45: #{tpu_custom_call.1} parent=1 // pred_fallthru
      _
    %v71 = vld [vmem:[%s0] sm:$0xff]
    %v72 = vld [vmem:[%s0 + $0x8] sm:$0xff]
    %v73 = vld [vmem:[%s0 + $0x10] sm:$0xff]
    %v74 = vld [vmem:[%s0 + $0x18] sm:$0xff]
    %v75 = vld [vmem:[%s0 + $0x20] sm:$0xff]
    %v76 = vld [vmem:[%s0 + $0x28] sm:$0xff]
    %v77 = vld [vmem:[%s0 + $0x30] sm:$0xff]
    %v78 = vld [vmem:[%s0 + $0x38] sm:$0xff]
    %v79 = vld [vmem:[%s1] sm:$0xff]
    %v80 = vld [vmem:[%s3] sm:$0xf]
    %v82 = vlaneseq
    %v83 = vshrl.u32 %v82, 7
    %v84 = vsub.s32 0, %v83
    %v85 = vrot.slane %v80, %v84
    %v86 = vlaneseq
    %v87 = vshrl.u32 %v86, 7
    %v88 = vsub.s32 1, %v87
    %v89 = vrot.slane %v80, %v88
    %v90 = vlaneseq
    %v91 = vshrl.u32 %v90, 7
    %v92 = vsub.s32 2, %v91
    %v93 = vrot.slane %v80, %v92
    %v94 = vlaneseq
    %v95 = vshrl.u32 %v94, 7
    %v96 = vsub.s32 3, %v95
    %v97 = vrot.slane %v80, %v96
    %v103 = vcombine.high %v79, %v79
    %v105 = vunpack.c.l.s4 1983009808
    %v106 = vunpack.c.0.s8 %v105
    %v107 = vlaneseq
    %v108 = vshrl.u32 %v107, 7
    %v109 = vsub.s32 %v106, %v108
    %v110 = vrot.slane %v79, %v109
    %v112 = vunpack.c.l.s4 1983009808
    %v113 = vunpack.c.0.s8 %v112
    %v114 = vlaneseq
    %v115 = vshrl.u32 %v114, 7
    %v116 = vsub.s32 %v113, %v115
    %v117 = vrot.slane %v103, %v116
    %v118 = vcombine.high %v110, %v110
    %v119 = vcombine.high %v117, %v117
    %vm120 = vcmask 15360
    %v122 = vsel %vm120, %v71, 0
    %v125 = vsel %vm120, %v72, 0
    %v128 = vsel %vm120, %v73, 0
    %v131 = vsel %vm120, %v74, 0
    %v134 = vsel %vm120, %v75, 0
    %v137 = vsel %vm120, %v76, 0
    %v140 = vsel %vm120, %v77, 0
    %v143 = vsel %vm120, %v78, 0
    %vm145 = vcmask 1041408
    %v146 = vsel %vm145, %v110, 0
    %v148 = vsel %vm145, %v118, 0
    %v150 = vsel %vm145, %v117, 0
    %v152 = vsel %vm145, %v119, 0
    %154 = vmatprep.subr.mxu0 %v148
    %155 = vmatpush1.msra.mxu0 %v146
    %156 = vmatprep.subr.mxu0 0.0
    %157 = vmatpush1.msra.mxu0 0.0
    %158 = vmatprep.subr.mxu0 0.0
    %159 = vmatpush1.msra.mxu0 0.0
    %160 = vmatprep.subr.mxu0 0.0
    %161 = vmatpush1.msra.mxu0 0.0
    %162 = vmatprep.subr.mxu0 0.0
    %163 = vmatpush1.msra.mxu0 0.0
    %164 = vmatprep.subr.mxu0 0.0
    %165 = vmatpush1.msra.mxu0 0.0
    %166 = vmatprep.subr.mxu0 0.0
    %167 = vmatpush1.msra.mxu0 0.0
    %168 = vmatprep.subr.mxu0 0.0
    %169 = vmatpush1.msra.mxu0 0.0
    %170 = vmatprep.subr.mxu0 0.0
    %171 = vmatpush1.msra.mxu0 0.0
    %172 = vmatprep.subr.mxu0 0.0
    %173 = vmatpush1.msra.mxu0 0.0
    %174 = vmatprep.subr.mxu0 0.0
    %175 = vmatpush1.msra.mxu0 0.0
    %176 = vmatprep.subr.mxu0 0.0
    %177 = vmatpush1.msra.mxu0 0.0
    %178 = vmatprep.subr.mxu0 0.0
    %179 = vmatpush1.msra.mxu0 0.0
    %180 = vmatprep.subr.mxu0 0.0
    %181 = vmatpush1.msra.mxu0 0.0
    %182 = vmatprep.subr.mxu0 0.0
    %183 = vmatpush1.msra.mxu0 0.0
    %184 = vmatprep.subr.mxu0 0.0
    %185 = vmatpush1.msra.mxu0 0.0
    %186 = vmatprep.subr.mxu0 0.0
    %187 = vmatpush1.msra.mxu0 0.0
    %188 = vmatprep.subr.mxu0 0.0
    %189 = vmatpush1.msra.mxu0 0.0
    %190 = vmatprep.subr.mxu0 0.0
    %191 = vmatpush1.msra.mxu0 0.0
    %192 = vmatprep.subr.mxu0 0.0
    %193 = vmatpush1.msra.mxu0 0.0
    %194 = vmatprep.subr.mxu0 0.0
    %195 = vmatpush1.msra.mxu0 0.0
    %196 = vmatprep.subr.mxu0 0.0
    %197 = vmatpush1.msra.mxu0 0.0
    %198 = vmatprep.subr.mxu0 0.0
    %199 = vmatpush1.msra.mxu0 0.0
    %200 = vmatprep.subr.mxu0 0.0
    %201 = vmatpush1.msra.mxu0 0.0
    %202 = vmatprep.subr.mxu0 0.0
    %203 = vmatpush1.msra.mxu0 0.0
    %204 = vmatprep.subr.mxu0 0.0
    %205 = vmatpush1.msra.mxu0 0.0
    %206 = vmatprep.subr.mxu0 0.0
    %207 = vmatpush1.msra.mxu0 0.0
    %208 = vmatprep.subr.mxu0 0.0
    %209 = vmatpush1.msra.mxu0 0.0
    %210 = vmatprep.subr.mxu0 0.0
    %211 = vmatpush1.msra.mxu0 0.0
    %212 = vmatprep.subr.mxu0 0.0
    %213 = vmatpush1.msra.mxu0 0.0
    %214 = vmatprep.subr.mxu0 0.0
    %215 = vmatpush1.msra.mxu0 0.0
    %216 = vmatprep.subr.mxu0 0.0
    %217 = vmatpush1.msra.mxu0 0.0
    %218 = vmatprep.mubr.f32.mxu0 0.0
    %219 = vmatmul.mubr.f32.gmra.mrb[0].mxu0 %v122
    %v220 = vpop.f32.mrb[0].mxu0
    %v221 = vadd.f32 %v85, %v220
    %v222 = vpop.f32.mrb[0].mxu0
    %v223 = vadd.f32 %v89, %v222
    %224 = vmatprep.mubr.f32.mxu0 0.0
    %225 = vmatmul.mubr.f32.gmra.mrb[0].mxu0 %v125
    %v226 = vpop.f32.mrb[0].mxu0
    %v227 = vadd.f32 %v85, %v226
    %v228 = vpop.f32.mrb[0].mxu0
    %v229 = vadd.f32 %v89, %v228
    %230 = vmatprep.mubr.f32.mxu0 0.0
    %231 = vmatmul.mubr.f32.gmra.mrb[0].mxu0 %v128
    %v232 = vpop.f32.mrb[0].mxu0
    %v233 = vadd.f32 %v85, %v232
    %v234 = vpop.f32.mrb[0].mxu0
    %v235 = vadd.f32 %v89, %v234
    %236 = vmatprep.mubr.f32.mxu0 0.0
    %237 = vmatmul.mubr.f32.gmra.mrb[0].mxu0 %v131
    %v238 = vpop.f32.mrb[0].mxu0
    %v239 = vadd.f32 %v85, %v238
    %v240 = vpop.f32.mrb[0].mxu0
    %v241 = vadd.f32 %v89, %v240
    %242 = vmatprep.mubr.f32.mxu0 0.0
    %243 = vmatmul.mubr.f32.gmra.mrb[0].mxu0 %v134
    %v244 = vpop.f32.mrb[0].mxu0
    %v245 = vadd.f32 %v85, %v244
    %v246 = vpop.f32.mrb[0].mxu0
    %v247 = vadd.f32 %v89, %v246
    %248 = vmatprep.mubr.f32.mxu0 0.0
    %249 = vmatmul.mubr.f32.gmra.mrb[0].mxu0 %v137
    %v250 = vpop.f32.mrb[0].mxu0
    %v251 = vadd.f32 %v85, %v250
    %v252 = vpop.f32.mrb[0].mxu0
    %v253 = vadd.f32 %v89, %v252
    %254 = vmatprep.mubr.f32.mxu0 0.0
    %255 = vmatmul.mubr.f32.gmra.mrb[0].mxu0 %v140
    %v256 = vpop.f32.mrb[0].mxu0
    %v257 = vadd.f32 %v85, %v256
    %v258 = vpop.f32.mrb[0].mxu0
    %v259 = vadd.f32 %v89, %v258
    %260 = vmatprep.mubr.f32.mxu0 0.0
    %261 = vmatmul.mubr.f32.gmra.mrb[0].mxu0 %v143
    %v262 = vpop.f32.mrb[0].mxu0
    %v263 = vadd.f32 %v85, %v262
    %v264 = vpop.f32.mrb[0].mxu0
    %v265 = vadd.f32 %v89, %v264
    %266 = vdwg.mxu0
    %267 = vmatprep.subr.mxu0 %v152
    %268 = vmatpush1.msra.mxu0 %v150
    %269 = vmatprep.subr.mxu0 0.0
    %270 = vmatpush1.msra.mxu0 0.0
    %271 = vmatprep.subr.mxu0 0.0
    %272 = vmatpush1.msra.mxu0 0.0
    %273 = vmatprep.subr.mxu0 0.0
    %274 = vmatpush1.msra.mxu0 0.0
    %275 = vmatprep.subr.mxu0 0.0
    %276 = vmatpush1.msra.mxu0 0.0
    %277 = vmatprep.subr.mxu0 0.0
    %278 = vmatpush1.msra.mxu0 0.0
    %279 = vmatprep.subr.mxu0 0.0
    %280 = vmatpush1.msra.mxu0 0.0
    %281 = vmatprep.subr.mxu0 0.0
    %282 = vmatpush1.msra.mxu0 0.0
    %283 = vmatprep.subr.mxu0 0.0
    %284 = vmatpush1.msra.mxu0 0.0
    %285 = vmatprep.subr.mxu0 0.0
    %286 = vmatpush1.msra.mxu0 0.0
    %287 = vmatprep.subr.mxu0 0.0
    %288 = vmatpush1.msra.mxu0 0.0
    %289 = vmatprep.subr.mxu0 0.0
    %290 = vmatpush1.msra.mxu0 0.0
    %291 = vmatprep.subr.mxu0 0.0
    %292 = vmatpush1.msra.mxu0 0.0
    %293 = vmatprep.subr.mxu0 0.0
    %294 = vmatpush1.msra.mxu0 0.0
    %295 = vmatprep.subr.mxu0 0.0
    %296 = vmatpush1.msra.mxu0 0.0
    %297 = vmatprep.subr.mxu0 0.0
    %298 = vmatpush1.msra.mxu0 0.0
    %299 = vmatprep.subr.mxu0 0.0
    %300 = vmatpush1.msra.mxu0 0.0
    %301 = vmatprep.subr.mxu0 0.0
    %302 = vmatpush1.msra.mxu0 0.0
    %303 = vmatprep.subr.mxu0 0.0
    %304 = vmatpush1.msra.mxu0 0.0
    %305 = vmatprep.subr.mxu0 0.0
    %306 = vmatpush1.msra.mxu0 0.0
    %307 = vmatprep.subr.mxu0 0.0
    %308 = vmatpush1.msra.mxu0 0.0
    %309 = vmatprep.subr.mxu0 0.0
    %310 = vmatpush1.msra.mxu0 0.0
    %311 = vmatprep.subr.mxu0 0.0
    %312 = vmatpush1.msra.mxu0 0.0
    %313 = vmatprep.subr.mxu0 0.0
    %314 = vmatpush1.msra.mxu0 0.0
    %315 = vmatprep.subr.mxu0 0.0
    %316 = vmatpush1.msra.mxu0 0.0
    %317 = vmatprep.subr.mxu0 0.0
    %318 = vmatpush1.msra.mxu0 0.0
    %319 = vmatprep.subr.mxu0 0.0
    %320 = vmatpush1.msra.mxu0 0.0
    %321 = vmatprep.subr.mxu0 0.0
    %322 = vmatpush1.msra.mxu0 0.0
    %323 = vmatprep.subr.mxu0 0.0
    %324 = vmatpush1.msra.mxu0 0.0
    %325 = vmatprep.subr.mxu0 0.0
    %326 = vmatpush1.msra.mxu0 0.0
    %327 = vmatprep.subr.mxu0 0.0
    %328 = vmatpush1.msra.mxu0 0.0
    %329 = vmatprep.subr.mxu0 0.0
    %330 = vmatpush1.msra.mxu0 0.0
    %331 = vmatprep.mubr.f32.mxu0 0.0
    %332 = vmatmul.mubr.f32.gmra.mrb[0].mxu0 %v122
    %v333 = vpop.f32.mrb[0].mxu0
    %v334 = vadd.f32 %v93, %v333
    %v335 = vpop.f32.mrb[0].mxu0
    %v336 = vadd.f32 %v97, %v335
    %337 = vmatprep.mubr.f32.mxu0 0.0
    %338 = vmatmul.mubr.f32.gmra.mrb[0].mxu0 %v125
    %v339 = vpop.f32.mrb[0].mxu0
    %v340 = vadd.f32 %v93, %v339
    %v341 = vpop.f32.mrb[0].mxu0
    %v342 = vadd.f32 %v97, %v341
    %343 = vmatprep.mubr.f32.mxu0 0.0
    %344 = vmatmul.mubr.f32.gmra.mrb[0].mxu0 %v128
    %v345 = vpop.f32.mrb[0].mxu0
    %v346 = vadd.f32 %v93, %v345
    %v347 = vpop.f32.mrb[0].mxu0
    %v348 = vadd.f32 %v97, %v347
    %349 = vmatprep.mubr.f32.mxu0 0.0
    %350 = vmatmul.mubr.f32.gmra.mrb[0].mxu0 %v131
    %v351 = vpop.f32.mrb[0].mxu0
    %v352 = vadd.f32 %v93, %v351
    %v353 = vpop.f32.mrb[0].mxu0
    %v354 = vadd.f32 %v97, %v353
    %355 = vmatprep.mubr.f32.mxu0 0.0
    %356 = vmatmul.mubr.f32.gmra.mrb[0].mxu0 %v134
    %v357 = vpop.f32.mrb[0].mxu0
    %v358 = vadd.f32 %v93, %v357
    %v359 = vpop.f32.mrb[0].mxu0
    %v360 = vadd.f32 %v97, %v359
    %361 = vmatprep.mubr.f32.mxu0 0.0
    %362 = vmatmul.mubr.f32.gmra.mrb[0].mxu0 %v137
    %v363 = vpop.f32.mrb[0].mxu0
    %v364 = vadd.f32 %v93, %v363
    %v365 = vpop.f32.mrb[0].mxu0
    %v366 = vadd.f32 %v97, %v365
    %367 = vmatprep.mubr.f32.mxu0 0.0
    %368 = vmatmul.mubr.f32.gmra.mrb[0].mxu0 %v140
    %v369 = vpop.f32.mrb[0].mxu0
    %v370 = vadd.f32 %v93, %v369
    %v371 = vpop.f32.mrb[0].mxu0
    %v372 = vadd.f32 %v97, %v371
    %373 = vmatprep.mubr.f32.mxu0 0.0
    %374 = vmatmul.mubr.f32.gmra.mrb[0].mxu0 %v143
    %v375 = vpop.f32.mrb[0].mxu0
    %v376 = vadd.f32 %v93, %v375
    %v377 = vpop.f32.mrb[0].mxu0
    %v378 = vadd.f32 %v97, %v377
    %379 = vdwg.mxu0
    %380 = vst [vmem:[#allocation2] sm:$0xff] %v221
    %381 = vst [vmem:[#allocation2 + $0x8] sm:$0xff] %v223
    %382 = vst [vmem:[#allocation2 + $0x10] sm:$0xff] %v334
    %383 = vst [vmem:[#allocation2 + $0x18] sm:$0xff] %v336
    %384 = vst [vmem:[#allocation2 + $0x20] sm:$0xff] %v227
    %385 = vst [vmem:[#allocation2 + $0x28] sm:$0xff] %v229
    %386 = vst [vmem:[#allocation2 + $0x30] sm:$0xff] %v340
    %387 = vst [vmem:[#allocation2 + $0x38] sm:$0xff] %v342
    %388 = vst [vmem:[#allocation2 + $0x40] sm:$0xff] %v233
    %389 = vst [vmem:[#allocation2 + $0x48] sm:$0xff] %v235
    %390 = vst [vmem:[#allocation2 + $0x50] sm:$0xff] %v346
    %391 = vst [vmem:[#allocation2 + $0x58] sm:$0xff] %v348
    %392 = vst [vmem:[#allocation2 + $0x60] sm:$0xff] %v239
    %393 = vst [vmem:[#allocation2 + $0x68] sm:$0xff] %v241
    %394 = vst [vmem:[#allocation2 + $0x70] sm:$0xff] %v352
    %395 = vst [vmem:[#allocation2 + $0x78] sm:$0xff] %v354
    %396 = vst [vmem:[#allocation2 + $0x80] sm:$0xff] %v245
    %397 = vst [vmem:[#allocation2 + $0x88] sm:$0xff] %v247
    %398 = vst [vmem:[#allocation2 + $0x90] sm:$0xff] %v358
    %399 = vst [vmem:[#allocation2 + $0x98] sm:$0xff] %v360
    %400 = vst [vmem:[#allocation2 + $0xa0] sm:$0xff] %v251
    %401 = vst [vmem:[#allocation2 + $0xa8] sm:$0xff] %v253
    %402 = vst [vmem:[#allocation2 + $0xb0] sm:$0xff] %v364
    %403 = vst [vmem:[#allocation2 + $0xb8] sm:$0xff] %v366
    %404 = vst [vmem:[#allocation2 + $0xc0] sm:$0xff] %v257
    %405 = vst [vmem:[#allocation2 + $0xc8] sm:$0xff] %v259
    %406 = vst [vmem:[#allocation2 + $0xd0] sm:$0xff] %v370
    %407 = vst [vmem:[#allocation2 + $0xd8] sm:$0xff] %v372
    %408 = vst [vmem:[#allocation2 + $0xe0] sm:$0xff] %v263
    %409 = vst [vmem:[#allocation2 + $0xe8] sm:$0xff] %v265
    %410 = vst [vmem:[#allocation2 + $0xf0] sm:$0xff] %v376
    %411 = vst [vmem:[#allocation2 + $0xf8] sm:$0xff] %v378
    %v412 = vld [vmem:[#allocation2] sm:$0xff]
    %v413 = vld [vmem:[#allocation2 + $0x8] sm:$0xff]
    %v414 = vld [vmem:[#allocation2 + $0x10] sm:$0xff]
    %v415 = vld [vmem:[#allocation2 + $0x18] sm:$0xff]
    %v416 = vld [vmem:[#allocation3] sm:$0xff]
    %v417 = vld [vmem:[#allocation3 + $0x8] sm:$0xff]
    %v418 = vld [vmem:[#allocation3 + $0x10] sm:$0xff]
    %v419 = vld [vmem:[#allocation3 + $0x18] sm:$0xff]
    %v420 = vld [vmem:[#allocation3 + $0x20] sm:$0xff]
    %v421 = vld [vmem:[#allocation3 + $0x28] sm:$0xff]
    %v422 = vld [vmem:[#allocation3 + $0x30] sm:$0xff]
    %v423 = vld [vmem:[#allocation3 + $0x38] sm:$0xff]
    %v424 = vld [vmem:[#allocation3 + $0x40] sm:$0xff]
    %v425 = vld [vmem:[#allocation3 + $0x48] sm:$0xff]
    %v426 = vld [vmem:[#allocation3 + $0x50] sm:$0xff]
    %v427 = vld [vmem:[#allocation3 + $0x58] sm:$0xff]
    %v428 = vld [vmem:[#allocation3 + $0x60] sm:$0xff]
    %v429 = vld [vmem:[#allocation3 + $0x68] sm:$0xff]
    %v430 = vld [vmem:[#allocation3 + $0x70] sm:$0xff]
    %v431 = vld [vmem:[#allocation3 + $0x78] sm:$0xff]
    %v432 = vld [vmem:[#allocation3 + $0x80] sm:$0xff]
    %v433 = vld [vmem:[#allocation3 + $0x88] sm:$0xff]
    %v434 = vld [vmem:[#allocation3 + $0x90] sm:$0xff]
    %v435 = vld [vmem:[#allocation3 + $0x98] sm:$0xff]
    %v436 = vld [vmem:[#allocation3 + $0xa0] sm:$0xff]
    %v437 = vld [vmem:[#allocation3 + $0xa8] sm:$0xff]
    %v438 = vld [vmem:[#allocation3 + $0xb0] sm:$0xff]
    %v439 = vld [vmem:[#allocation3 + $0xb8] sm:$0xff]
    %v440 = vld [vmem:[#allocation3 + $0xc0] sm:$0xff]
    %v441 = vld [vmem:[#allocation3 + $0xc8] sm:$0xff]
    %v442 = vld [vmem:[#allocation3 + $0xd0] sm:$0xff]
    %v443 = vld [vmem:[#allocation3 + $0xd8] sm:$0xff]
    %v444 = vld [vmem:[#allocation3 + $0xe0] sm:$0xff]
    %v445 = vld [vmem:[#allocation3 + $0xe8] sm:$0xff]
    %v446 = vld [vmem:[#allocation3 + $0xf0] sm:$0xff]
    %v447 = vld [vmem:[#allocation3 + $0xf8] sm:$0xff]
    %v448 = vld [vmem:[#allocation3 + $0x100] sm:$0xff]
    %v449 = vld [vmem:[#allocation3 + $0x108] sm:$0xff]
    %v450 = vld [vmem:[#allocation3 + $0x110] sm:$0xff]
    %v451 = vld [vmem:[#allocation3 + $0x118] sm:$0xff]
    %v452 = vld [vmem:[#allocation3 + $0x120] sm:$0xff]
    %v453 = vld [vmem:[#allocation3 + $0x128] sm:$0xff]
    %v454 = vld [vmem:[#allocation3 + $0x130] sm:$0xff]
    %v455 = vld [vmem:[#allocation3 + $0x138] sm:$0xff]
    %v456 = vld [vmem:[#allocation3 + $0x140] sm:$0xff]
    %v457 = vld [vmem:[#allocation3 + $0x148] sm:$0xff]
    %v458 = vld [vmem:[#allocation3 + $0x150] sm:$0xff]
    %v459 = vld [vmem:[#allocation3 + $0x158] sm:$0xff]
    %v460 = vld [vmem:[#allocation3 + $0x160] sm:$0xff]
    %v461 = vld [vmem:[#allocation3 + $0x168] sm:$0xff]
    %v462 = vld [vmem:[#allocation3 + $0x170] sm:$0xff]
    %v463 = vld [vmem:[#allocation3 + $0x178] sm:$0xff]
    %v464 = vld [vmem:[#allocation3 + $0x180] sm:$0xff]
    %v465 = vld [vmem:[#allocation3 + $0x188] sm:$0xff]
    %v466 = vld [vmem:[#allocation3 + $0x190] sm:$0xff]
    %v467 = vld [vmem:[#allocation3 + $0x198] sm:$0xff]
    %v468 = vld [vmem:[#allocation3 + $0x1a0] sm:$0xff]
    %v469 = vld [vmem:[#allocation3 + $0x1a8] sm:$0xff]
    %v470 = vld [vmem:[#allocation3 + $0x1b0] sm:$0xff]
    %v471 = vld [vmem:[#allocation3 + $0x1b8] sm:$0xff]
    %v472 = vld [vmem:[#allocation3 + $0x1c0] sm:$0xff]
    %v473 = vld [vmem:[#allocation3 + $0x1c8] sm:$0xff]
    %v474 = vld [vmem:[#allocation3 + $0x1d0] sm:$0xff]
    %v475 = vld [vmem:[#allocation3 + $0x1d8] sm:$0xff]
    %v476 = vld [vmem:[#allocation3 + $0x1e0] sm:$0xff]
    %v477 = vld [vmem:[#allocation3 + $0x1e8] sm:$0xff]
    %v478 = vld [vmem:[#allocation3 + $0x1f0] sm:$0xff]
    %v479 = vld [vmem:[#allocation3 + $0x1f8] sm:$0xff]
    %480 = vmatprep.subr.mxu0 %v417
    %481 = vmatpush1.msra.mxu0 %v416
    %482 = vmatprep.subr.mxu0 %v421
    %483 = vmatpush1.msra.mxu0 %v420
    %484 = vmatprep.subr.mxu0 %v425
    %485 = vmatpush1.msra.mxu0 %v424
    %486 = vmatprep.subr.mxu0 %v429
    %487 = vmatpush1.msra.mxu0 %v428
    %488 = vmatprep.subr.mxu0 %v433
    %489 = vmatpush1.msra.mxu0 %v432
    %490 = vmatprep.subr.mxu0 %v437
    %491 = vmatpush1.msra.mxu0 %v436
    %492 = vmatprep.subr.mxu0 %v441
    %493 = vmatpush1.msra.mxu0 %v440
    %494 = vmatprep.subr.mxu0 %v445
    %495 = vmatpush1.msra.mxu0 %v444
    %496 = vmatprep.subr.mxu0 %v449
    %497 = vmatpush1.msra.mxu0 %v448
    %498 = vmatprep.subr.mxu0 %v453
    %499 = vmatpush1.msra.mxu0 %v452
    %500 = vmatprep.subr.mxu0 %v457
    %501 = vmatpush1.msra.mxu0 %v456
    %502 = vmatprep.subr.mxu0 %v461
    %503 = vmatpush1.msra.mxu0 %v460
    %504 = vmatprep.subr.mxu0 %v465
    %505 = vmatpush1.msra.mxu0 %v464
    %506 = vmatprep.subr.mxu0 %v469
    %507 = vmatpush1.msra.mxu0 %v468
    %508 = vmatprep.subr.mxu0 %v473
    %509 = vmatpush1.msra.mxu0 %v472
    %510 = vmatprep.subr.mxu0 %v477
    %511 = vmatpush1.msra.mxu0 %v476
    %512 = vmatprep.subr.mxu0 0.0
    %513 = vmatpush1.msra.mxu0 0.0
    %514 = vmatprep.subr.mxu0 0.0
    %515 = vmatpush1.msra.mxu0 0.0
    %516 = vmatprep.subr.mxu0 0.0
    %517 = vmatpush1.msra.mxu0 0.0
    %518 = vmatprep.subr.mxu0 0.0
    %519 = vmatpush1.msra.mxu0 0.0
    %520 = vmatprep.subr.mxu0 0.0
    %521 = vmatpush1.msra.mxu0 0.0
    %522 = vmatprep.subr.mxu0 0.0
    %523 = vmatpush1.msra.mxu0 0.0
    %524 = vmatprep.subr.mxu0 0.0
    %525 = vmatpush1.msra.mxu0 0.0
    %526 = vmatprep.subr.mxu0 0.0
    %527 = vmatpush1.msra.mxu0 0.0
    %528 = vmatprep.subr.mxu0 0.0
    %529 = vmatpush1.msra.mxu0 0.0
    %530 = vmatprep.subr.mxu0 0.0
    %531 = vmatpush1.msra.mxu0 0.0
    %532 = vmatprep.subr.mxu0 0.0
    %533 = vmatpush1.msra.mxu0 0.0
    %534 = vmatprep.subr.mxu0 0.0
    %535 = vmatpush1.msra.mxu0 0.0
    %536 = vmatprep.subr.mxu0 0.0
    %537 = vmatpush1.msra.mxu0 0.0
    %538 = vmatprep.subr.mxu0 0.0
    %539 = vmatpush1.msra.mxu0 0.0
    %540 = vmatprep.subr.mxu0 0.0
    %541 = vmatpush1.msra.mxu0 0.0
    %542 = vmatprep.subr.mxu0 0.0
    %543 = vmatpush1.msra.mxu0 0.0
    %544 = vmatprep.mubr.f32.mxu0 0.0
    %545 = vmatmul.mubr.f32.gmra.mrb[0].mxu0 0.0
    %v546 = vpop.f32.mrb[0].mxu0
    %v547 = vadd.f32 0.0, %v546
    %v548 = vpop.f32.mrb[0].mxu0
    %v549 = vadd.f32 0.0, %v548
    %550 = vdwg.mxu0
    %551 = vmatprep.subr.mxu0 %v419
    %552 = vmatpush1.msra.mxu0 %v418
    %553 = vmatprep.subr.mxu0 %v423
    %554 = vmatpush1.msra.mxu0 %v422
    %555 = vmatprep.subr.mxu0 %v427
    %556 = vmatpush1.msra.mxu0 %v426
    %557 = vmatprep.subr.mxu0 %v431
    %558 = vmatpush1.msra.mxu0 %v430
    %559 = vmatprep.subr.mxu0 %v435
    %560 = vmatpush1.msra.mxu0 %v434
    %561 = vmatprep.subr.mxu0 %v439
    %562 = vmatpush1.msra.mxu0 %v438
    %563 = vmatprep.subr.mxu0 %v443
    %564 = vmatpush1.msra.mxu0 %v442
    %565 = vmatprep.subr.mxu0 %v447
    %566 = vmatpush1.msra.mxu0 %v446
    %567 = vmatprep.subr.mxu0 %v451
    %568 = vmatpush1.msra.mxu0 %v450
    %569 = vmatprep.subr.mxu0 %v455
    %570 = vmatpush1.msra.mxu0 %v454
    %571 = vmatprep.subr.mxu0 %v459
    %572 = vmatpush1.msra.mxu0 %v458
    %573 = vmatprep.subr.mxu0 %v463
    %574 = vmatpush1.msra.mxu0 %v462
    %575 = vmatprep.subr.mxu0 %v467
    %576 = vmatpush1.msra.mxu0 %v466
    %577 = vmatprep.subr.mxu0 %v471
    %578 = vmatpush1.msra.mxu0 %v470
    %579 = vmatprep.subr.mxu0 %v475
    %580 = vmatpush1.msra.mxu0 %v474
    %581 = vmatprep.subr.mxu0 %v479
    %582 = vmatpush1.msra.mxu0 %v478
    %583 = vmatprep.subr.mxu0 0.0
    %584 = vmatpush1.msra.mxu0 0.0
    %585 = vmatprep.subr.mxu0 0.0
    %586 = vmatpush1.msra.mxu0 0.0
    %587 = vmatprep.subr.mxu0 0.0
    %588 = vmatpush1.msra.mxu0 0.0
    %589 = vmatprep.subr.mxu0 0.0
    %590 = vmatpush1.msra.mxu0 0.0
    %591 = vmatprep.subr.mxu0 0.0
    %592 = vmatpush1.msra.mxu0 0.0
    %593 = vmatprep.subr.mxu0 0.0
    %594 = vmatpush1.msra.mxu0 0.0
    %595 = vmatprep.subr.mxu0 0.0
    %596 = vmatpush1.msra.mxu0 0.0
    %597 = vmatprep.subr.mxu0 0.0
    %598 = vmatpush1.msra.mxu0 0.0
    %599 = vmatprep.subr.mxu0 0.0
    %600 = vmatpush1.msra.mxu0 0.0
    %601 = vmatprep.subr.mxu0 0.0
    %602 = vmatpush1.msra.mxu0 0.0
    %603 = vmatprep.subr.mxu0 0.0
    %604 = vmatpush1.msra.mxu0 0.0
    %605 = vmatprep.subr.mxu0 0.0
    %606 = vmatpush1.msra.mxu0 0.0
    %607 = vmatprep.subr.mxu0 0.0
    %608 = vmatpush1.msra.mxu0 0.0
    %609 = vmatprep.subr.mxu0 0.0
    %610 = vmatpush1.msra.mxu0 0.0
    %611 = vmatprep.subr.mxu0 0.0
    %612 = vmatpush1.msra.mxu0 0.0
    %613 = vmatprep.subr.mxu0 0.0
    %614 = vmatpush1.msra.mxu0 0.0
    %615 = vmatprep.mubr.f32.mxu0 0.0
    %616 = vmatmul.mubr.f32.gmra.mrb[0].mxu0 0.0
    %v617 = vpop.f32.mrb[0].mxu0
    %v618 = vadd.f32 0.0, %v617
    %v619 = vpop.f32.mrb[0].mxu0
    %v620 = vadd.f32 0.0, %v619
    %621 = vdwg.mxu0
    %v622 = vadd.f32 %v412, %v547
    %v623 = vadd.f32 %v413, %v549
    %v624 = vadd.f32 %v414, %v618
    %v625 = vadd.f32 %v415, %v620
    %v626 = vxor.u32 %v622, 2147483648
    %v627 = vmul.f32 %v626, 1.442695
    %v628 = vpow.pop %v627
    %v629 = vadd.f32 %v628, 1.0
    %v630 = vrcp.pop %v629
    %v631 = vmul.f32 1.0, %v630
    %v632 = vxor.u32 %v623, 2147483648
    %v633 = vmul.f32 %v632, 1.442695
    %v634 = vpow.pop %v633
    %v635 = vadd.f32 %v634, 1.0
    %v636 = vrcp.pop %v635
    %v637 = vmul.f32 1.0, %v636
    %v638 = vtanh.pop %v624
    %v639 = vxor.u32 %v625, 2147483648
    %v640 = vmul.f32 %v639, 1.442695
    %v641 = vpow.pop %v640
    %v642 = vadd.f32 %v641, 1.0
    %v643 = vrcp.pop %v642
    %v644 = vmul.f32 1.0, %v643
    %v645 = vmul.f32 %v637, 0.0
    %v646 = vmul.f32 %v631, %v638
    %v647 = vadd.f32 %v645, %v646
    %v648 = vtanh.pop %v647
    %v649 = vmul.f32 %v644, %v648
    %s650 = scalar_lea.vmem [#allocation2], 32
    %v651 = vld [vmem:[%s650] sm:$0xff]
    %v652 = vld [vmem:[%s650 + $0x8] sm:$0xff]
    %v653 = vld [vmem:[%s650 + $0x10] sm:$0xff]
    %v654 = vld [vmem:[%s650 + $0x18] sm:$0xff]
    %655 = vmatprep.subr.mxu0 %v417
    %656 = vmatpush1.msra.mxu0 %v416
    %657 = vmatprep.subr.mxu0 %v421
    %658 = vmatpush1.msra.mxu0 %v420
    %659 = vmatprep.subr.mxu0 %v425
    %660 = vmatpush1.msra.mxu0 %v424
    %661 = vmatprep.subr.mxu0 %v429
    %662 = vmatpush1.msra.mxu0 %v428
    %663 = vmatprep.subr.mxu0 %v433
    %664 = vmatpush1.msra.mxu0 %v432
    %665 = vmatprep.subr.mxu0 %v437
    %666 = vmatpush1.msra.mxu0 %v436
    %667 = vmatprep.subr.mxu0 %v441
    %668 = vmatpush1.msra.mxu0 %v440
    %669 = vmatprep.subr.mxu0 %v445
    %670 = vmatpush1.msra.mxu0 %v444
    %671 = vmatprep.subr.mxu0 %v449
    %672 = vmatpush1.msra.mxu0 %v448
    %673 = vmatprep.subr.mxu0 %v453
    %674 = vmatpush1.msra.mxu0 %v452
    %675 = vmatprep.subr.mxu0 %v457
    %676 = vmatpush1.msra.mxu0 %v456
    %677 = vmatprep.subr.mxu0 %v461
    %678 = vmatpush1.msra.mxu0 %v460
    %679 = vmatprep.subr.mxu0 %v465
    %680 = vmatpush1.msra.mxu0 %v464
    %681 = vmatprep.subr.mxu0 %v469
    %682 = vmatpush1.msra.mxu0 %v468
    %683 = vmatprep.subr.mxu0 %v473
    %684 = vmatpush1.msra.mxu0 %v472
    %685 = vmatprep.subr.mxu0 %v477
    %686 = vmatpush1.msra.mxu0 %v476
    %687 = vmatprep.subr.mxu0 0.0
    %688 = vmatpush1.msra.mxu0 0.0
    %689 = vmatprep.subr.mxu0 0.0
    %690 = vmatpush1.msra.mxu0 0.0
    %691 = vmatprep.subr.mxu0 0.0
    %692 = vmatpush1.msra.mxu0 0.0
    %693 = vmatprep.subr.mxu0 0.0
    %694 = vmatpush1.msra.mxu0 0.0
    %695 = vmatprep.subr.mxu0 0.0
    %696 = vmatpush1.msra.mxu0 0.0
    %697 = vmatprep.subr.mxu0 0.0
    %698 = vmatpush1.msra.mxu0 0.0
    %699 = vmatprep.subr.mxu0 0.0
    %700 = vmatpush1.msra.mxu0 0.0
    %701 = vmatprep.subr.mxu0 0.0
    %702 = vmatpush1.msra.mxu0 0.0
    %703 = vmatprep.subr.mxu0 0.0
    %704 = vmatpush1.msra.mxu0 0.0
    %705 = vmatprep.subr.mxu0 0.0
    %706 = vmatpush1.msra.mxu0 0.0
    %707 = vmatprep.subr.mxu0 0.0
    %708 = vmatpush1.msra.mxu0 0.0
    %709 = vmatprep.subr.mxu0 0.0
    %710 = vmatpush1.msra.mxu0 0.0
    %711 = vmatprep.subr.mxu0 0.0
    %712 = vmatpush1.msra.mxu0 0.0
    %713 = vmatprep.subr.mxu0 0.0
    %714 = vmatpush1.msra.mxu0 0.0
    %715 = vmatprep.subr.mxu0 0.0
    %716 = vmatpush1.msra.mxu0 0.0
    %717 = vmatprep.subr.mxu0 0.0
    %718 = vmatpush1.msra.mxu0 0.0
    %719 = vmatprep.mubr.f32.mxu0 0.0
    %720 = vmatmul.mubr.f32.gmra.mrb[0].mxu0 %v649
    %v721 = vpop.f32.mrb[0].mxu0
    %v722 = vadd.f32 0.0, %v721
    %v723 = vpop.f32.mrb[0].mxu0
    %v724 = vadd.f32 0.0, %v723
    %725 = vdwg.mxu0
    %726 = vmatprep.subr.mxu0 %v419
    %727 = vmatpush1.msra.mxu0 %v418
    %728 = vmatprep.subr.mxu0 %v423
    %729 = vmatpush1.msra.mxu0 %v422
    %730 = vmatprep.subr.mxu0 %v427
    %731 = vmatpush1.msra.mxu0 %v426
    %732 = vmatprep.subr.mxu0 %v431
    %733 = vmatpush1.msra.mxu0 %v430
    %734 = vmatprep.subr.mxu0 %v435
    %735 = vmatpush1.msra.mxu0 %v434
    %736 = vmatprep.subr.mxu0 %v439
    %737 = vmatpush1.msra.mxu0 %v438
    %738 = vmatprep.subr.mxu0 %v443
    %739 = vmatpush1.msra.mxu0 %v442
    %740 = vmatprep.subr.mxu0 %v447
    %741 = vmatpush1.msra.mxu0 %v446
    %742 = vmatprep.subr.mxu0 %v451
    %743 = vmatpush1.msra.mxu0 %v450
    %744 = vmatprep.subr.mxu0 %v455
    %745 = vmatpush1.msra.mxu0 %v454
    %746 = vmatprep.subr.mxu0 %v459
    %747 = vmatpush1.msra.mxu0 %v458
    %748 = vmatprep.subr.mxu0 %v463
    %749 = vmatpush1.msra.mxu0 %v462
    %750 = vmatprep.subr.mxu0 %v467
    %751 = vmatpush1.msra.mxu0 %v466
    %752 = vmatprep.subr.mxu0 %v471
    %753 = vmatpush1.msra.mxu0 %v470
    %754 = vmatprep.subr.mxu0 %v475
    %755 = vmatpush1.msra.mxu0 %v474
    %756 = vmatprep.subr.mxu0 %v479
    %757 = vmatpush1.msra.mxu0 %v478
    %758 = vmatprep.subr.mxu0 0.0
    %759 = vmatpush1.msra.mxu0 0.0
    %760 = vmatprep.subr.mxu0 0.0
    %761 = vmatpush1.msra.mxu0 0.0
    %762 = vmatprep.subr.mxu0 0.0
    %763 = vmatpush1.msra.mxu0 0.0
    %764 = vmatprep.subr.mxu0 0.0
    %765 = vmatpush1.msra.mxu0 0.0
    %766 = vmatprep.subr.mxu0 0.0
    %767 = vmatpush1.msra.mxu0 0.0
    %768 = vmatprep.subr.mxu0 0.0
    %769 = vmatpush1.msra.mxu0 0.0
    %770 = vmatprep.subr.mxu0 0.0
    %771 = vmatpush1.msra.mxu0 0.0
    %772 = vmatprep.subr.mxu0 0.0
    %773 = vmatpush1.msra.mxu0 0.0
    %774 = vmatprep.subr.mxu0 0.0
    %775 = vmatpush1.msra.mxu0 0.0
    %776 = vmatprep.subr.mxu0 0.0
    %777 = vmatpush1.msra.mxu0 0.0
    %778 = vmatprep.subr.mxu0 0.0
    %779 = vmatpush1.msra.mxu0 0.0
    %780 = vmatprep.subr.mxu0 0.0
    %781 = vmatpush1.msra.mxu0 0.0
    %782 = vmatprep.subr.mxu0 0.0
    %783 = vmatpush1.msra.mxu0 0.0
    %784 = vmatprep.subr.mxu0 0.0
    %785 = vmatpush1.msra.mxu0 0.0
    %786 = vmatprep.subr.mxu0 0.0
    %787 = vmatpush1.msra.mxu0 0.0
    %788 = vmatprep.subr.mxu0 0.0
    %789 = vmatpush1.msra.mxu0 0.0
    %790 = vmatprep.mubr.f32.mxu0 0.0
    %791 = vmatmul.mubr.f32.gmra.mrb[0].mxu0 %v649
    %v792 = vpop.f32.mrb[0].mxu0
    %v793 = vadd.f32 0.0, %v792
    %v794 = vpop.f32.mrb[0].mxu0
    %v795 = vadd.f32 0.0, %v794
    %796 = vdwg.mxu0
    %v797 = vadd.f32 %v651, %v722
    %v798 = vadd.f32 %v652, %v724
    %v799 = vadd.f32 %v653, %v793
    %v800 = vadd.f32 %v654, %v795
    %v801 = vxor.u32 %v797, 2147483648
    %v802 = vmul.f32 %v801, 1.442695
    %v803 = vpow.pop %v802
    %v804 = vadd.f32 %v803, 1.0
    %v805 = vrcp.pop %v804
    %v806 = vmul.f32 1.0, %v805
    %v807 = vxor.u32 %v798, 2147483648
    %v808 = vmul.f32 %v807, 1.442695
    %v809 = vpow.pop %v808
    %v810 = vadd.f32 %v809, 1.0
    %v811 = vrcp.pop %v810
    %v812 = vmul.f32 1.0, %v811
    %v813 = vtanh.pop %v799
    %v814 = vxor.u32 %v800, 2147483648
    %v815 = vmul.f32 %v814, 1.442695
    %v816 = vpow.pop %v815
    %v817 = vadd.f32 %v816, 1.0
    %v818 = vrcp.pop %v817
    %v819 = vmul.f32 1.0, %v818
    %v820 = vmul.f32 %v812, %v647
    %v821 = vmul.f32 %v806, %v813
    %v822 = vadd.f32 %v820, %v821
    %v823 = vtanh.pop %v822
    %v824 = vmul.f32 %v819, %v823
    %s825 = scalar_lea.vmem [#allocation2], 64
    %v826 = vld [vmem:[%s825] sm:$0xff]
    %v827 = vld [vmem:[%s825 + $0x8] sm:$0xff]
    %v828 = vld [vmem:[%s825 + $0x10] sm:$0xff]
    %v829 = vld [vmem:[%s825 + $0x18] sm:$0xff]
    %830 = vmatprep.subr.mxu0 %v417
    %831 = vmatpush1.msra.mxu0 %v416
    %832 = vmatprep.subr.mxu0 %v421
    %833 = vmatpush1.msra.mxu0 %v420
    %834 = vmatprep.subr.mxu0 %v425
    %835 = vmatpush1.msra.mxu0 %v424
    %836 = vmatprep.subr.mxu0 %v429
    %837 = vmatpush1.msra.mxu0 %v428
    %838 = vmatprep.subr.mxu0 %v433
    %839 = vmatpush1.msra.mxu0 %v432
    %840 = vmatprep.subr.mxu0 %v437
    %841 = vmatpush1.msra.mxu0 %v436
    %842 = vmatprep.subr.mxu0 %v441
    %843 = vmatpush1.msra.mxu0 %v440
    %844 = vmatprep.subr.mxu0 %v445
    %845 = vmatpush1.msra.mxu0 %v444
    %846 = vmatprep.subr.mxu0 %v449
    %847 = vmatpush1.msra.mxu0 %v448
    %848 = vmatprep.subr.mxu0 %v453
    %849 = vmatpush1.msra.mxu0 %v452
    %850 = vmatprep.subr.mxu0 %v457
    %851 = vmatpush1.msra.mxu0 %v456
    %852 = vmatprep.subr.mxu0 %v461
    %853 = vmatpush1.msra.mxu0 %v460
    %854 = vmatprep.subr.mxu0 %v465
    %855 = vmatpush1.msra.mxu0 %v464
    %856 = vmatprep.subr.mxu0 %v469
    %857 = vmatpush1.msra.mxu0 %v468
    %858 = vmatprep.subr.mxu0 %v473
    %859 = vmatpush1.msra.mxu0 %v472
    %860 = vmatprep.subr.mxu0 %v477
    %861 = vmatpush1.msra.mxu0 %v476
    %862 = vmatprep.subr.mxu0 0.0
    %863 = vmatpush1.msra.mxu0 0.0
    %864 = vmatprep.subr.mxu0 0.0
    %865 = vmatpush1.msra.mxu0 0.0
    %866 = vmatprep.subr.mxu0 0.0
    %867 = vmatpush1.msra.mxu0 0.0
    %868 = vmatprep.subr.mxu0 0.0
    %869 = vmatpush1.msra.mxu0 0.0
    %870 = vmatprep.subr.mxu0 0.0
    %871 = vmatpush1.msra.mxu0 0.0
    %872 = vmatprep.subr.mxu0 0.0
    %873 = vmatpush1.msra.mxu0 0.0
    %874 = vmatprep.subr.mxu0 0.0
    %875 = vmatpush1.msra.mxu0 0.0
    %876 = vmatprep.subr.mxu0 0.0
    %877 = vmatpush1.msra.mxu0 0.0
    %878 = vmatprep.subr.mxu0 0.0
    %879 = vmatpush1.msra.mxu0 0.0
    %880 = vmatprep.subr.mxu0 0.0
    %881 = vmatpush1.msra.mxu0 0.0
    %882 = vmatprep.subr.mxu0 0.0
    %883 = vmatpush1.msra.mxu0 0.0
    %884 = vmatprep.subr.mxu0 0.0
    %885 = vmatpush1.msra.mxu0 0.0
    %886 = vmatprep.subr.mxu0 0.0
    %887 = vmatpush1.msra.mxu0 0.0
    %888 = vmatprep.subr.mxu0 0.0
    %889 = vmatpush1.msra.mxu0 0.0
    %890 = vmatprep.subr.mxu0 0.0
    %891 = vmatpush1.msra.mxu0 0.0
    %892 = vmatprep.subr.mxu0 0.0
    %893 = vmatpush1.msra.mxu0 0.0
    %894 = vmatprep.mubr.f32.mxu0 0.0
    %895 = vmatmul.mubr.f32.gmra.mrb[0].mxu0 %v824
    %v896 = vpop.f32.mrb[0].mxu0
    %v897 = vadd.f32 0.0, %v896
    %v898 = vpop.f32.mrb[0].mxu0
    %v899 = vadd.f32 0.0, %v898
    %900 = vdwg.mxu0
    %901 = vmatprep.subr.mxu0 %v419
    %902 = vmatpush1.msra.mxu0 %v418
    %903 = vmatprep.subr.mxu0 %v423
    %904 = vmatpush1.msra.mxu0 %v422
    %905 = vmatprep.subr.mxu0 %v427
    %906 = vmatpush1.msra.mxu0 %v426
    %907 = vmatprep.subr.mxu0 %v431
    %908 = vmatpush1.msra.mxu0 %v430
    %909 = vmatprep.subr.mxu0 %v435
    %910 = vmatpush1.msra.mxu0 %v434
    %911 = vmatprep.subr.mxu0 %v439
    %912 = vmatpush1.msra.mxu0 %v438
    %913 = vmatprep.subr.mxu0 %v443
    %914 = vmatpush1.msra.mxu0 %v442
    %915 = vmatprep.subr.mxu0 %v447
    %916 = vmatpush1.msra.mxu0 %v446
    %917 = vmatprep.subr.mxu0 %v451
    %918 = vmatpush1.msra.mxu0 %v450
    %919 = vmatprep.subr.mxu0 %v455
    %920 = vmatpush1.msra.mxu0 %v454
    %921 = vmatprep.subr.mxu0 %v459
    %922 = vmatpush1.msra.mxu0 %v458
    %923 = vmatprep.subr.mxu0 %v463
    %924 = vmatpush1.msra.mxu0 %v462
    %925 = vmatprep.subr.mxu0 %v467
    %926 = vmatpush1.msra.mxu0 %v466
    %927 = vmatprep.subr.mxu0 %v471
    %928 = vmatpush1.msra.mxu0 %v470
    %929 = vmatprep.subr.mxu0 %v475
    %930 = vmatpush1.msra.mxu0 %v474
    %931 = vmatprep.subr.mxu0 %v479
    %932 = vmatpush1.msra.mxu0 %v478
    %933 = vmatprep.subr.mxu0 0.0
    %934 = vmatpush1.msra.mxu0 0.0
    %935 = vmatprep.subr.mxu0 0.0
    %936 = vmatpush1.msra.mxu0 0.0
    %937 = vmatprep.subr.mxu0 0.0
    %938 = vmatpush1.msra.mxu0 0.0
    %939 = vmatprep.subr.mxu0 0.0
    %940 = vmatpush1.msra.mxu0 0.0
    %941 = vmatprep.subr.mxu0 0.0
    %942 = vmatpush1.msra.mxu0 0.0
    %943 = vmatprep.subr.mxu0 0.0
    %944 = vmatpush1.msra.mxu0 0.0
    %945 = vmatprep.subr.mxu0 0.0
    %946 = vmatpush1.msra.mxu0 0.0
    %947 = vmatprep.subr.mxu0 0.0
    %948 = vmatpush1.msra.mxu0 0.0
    %949 = vmatprep.subr.mxu0 0.0
    %950 = vmatpush1.msra.mxu0 0.0
    %951 = vmatprep.subr.mxu0 0.0
    %952 = vmatpush1.msra.mxu0 0.0
    %953 = vmatprep.subr.mxu0 0.0
    %954 = vmatpush1.msra.mxu0 0.0
    %955 = vmatprep.subr.mxu0 0.0
    %956 = vmatpush1.msra.mxu0 0.0
    %957 = vmatprep.subr.mxu0 0.0
    %958 = vmatpush1.msra.mxu0 0.0
    %959 = vmatprep.subr.mxu0 0.0
    %960 = vmatpush1.msra.mxu0 0.0
    %961 = vmatprep.subr.mxu0 0.0
    %962 = vmatpush1.msra.mxu0 0.0
    %963 = vmatprep.subr.mxu0 0.0
    %964 = vmatpush1.msra.mxu0 0.0
    %965 = vmatprep.mubr.f32.mxu0 0.0
    %966 = vmatmul.mubr.f32.gmra.mrb[0].mxu0 %v824
    %v967 = vpop.f32.mrb[0].mxu0
    %v968 = vadd.f32 0.0, %v967
    %v969 = vpop.f32.mrb[0].mxu0
    %v970 = vadd.f32 0.0, %v969
    %971 = vdwg.mxu0
    %v972 = vadd.f32 %v826, %v897
    %v973 = vadd.f32 %v827, %v899
    %v974 = vadd.f32 %v828, %v968
    %v975 = vadd.f32 %v829, %v970
    %v976 = vxor.u32 %v972, 2147483648
    %v977 = vmul.f32 %v976, 1.442695
    %v978 = vpow.pop %v977
    %v979 = vadd.f32 %v978, 1.0
    %v980 = vrcp.pop %v979
    %v981 = vmul.f32 1.0, %v980
    %v982 = vxor.u32 %v973, 2147483648
    %v983 = vmul.f32 %v982, 1.442695
    %v984 = vpow.pop %v983
    %v985 = vadd.f32 %v984, 1.0
    %v986 = vrcp.pop %v985
    %v987 = vmul.f32 1.0, %v986
    %v988 = vtanh.pop %v974
    %v989 = vxor.u32 %v975, 2147483648
    %v990 = vmul.f32 %v989, 1.442695
    %v991 = vpow.pop %v990
    %v992 = vadd.f32 %v991, 1.0
    %v993 = vrcp.pop %v992
    %v994 = vmul.f32 1.0, %v993
    %v995 = vmul.f32 %v987, %v822
    %v996 = vmul.f32 %v981, %v988
    %v997 = vadd.f32 %v995, %v996
    %v998 = vtanh.pop %v997
    %v999 = vmul.f32 %v994, %v998
    %s1000 = scalar_lea.vmem [#allocation2], 96
    %v1001 = vld [vmem:[%s1000] sm:$0xff]
    %v1002 = vld [vmem:[%s1000 + $0x8] sm:$0xff]
    %v1003 = vld [vmem:[%s1000 + $0x10] sm:$0xff]
    %v1004 = vld [vmem:[%s1000 + $0x18] sm:$0xff]
    %1005 = vmatprep.subr.mxu0 %v417
    %1006 = vmatpush1.msra.mxu0 %v416
    %1007 = vmatprep.subr.mxu0 %v421
    %1008 = vmatpush1.msra.mxu0 %v420
    %1009 = vmatprep.subr.mxu0 %v425
    %1010 = vmatpush1.msra.mxu0 %v424
    %1011 = vmatprep.subr.mxu0 %v429
    %1012 = vmatpush1.msra.mxu0 %v428
    %1013 = vmatprep.subr.mxu0 %v433
    %1014 = vmatpush1.msra.mxu0 %v432
    %1015 = vmatprep.subr.mxu0 %v437
    %1016 = vmatpush1.msra.mxu0 %v436
    %1017 = vmatprep.subr.mxu0 %v441
    %1018 = vmatpush1.msra.mxu0 %v440
    %1019 = vmatprep.subr.mxu0 %v445
    %1020 = vmatpush1.msra.mxu0 %v444
    %1021 = vmatprep.subr.mxu0 %v449
    %1022 = vmatpush1.msra.mxu0 %v448
    %1023 = vmatprep.subr.mxu0 %v453
    %1024 = vmatpush1.msra.mxu0 %v452
    %1025 = vmatprep.subr.mxu0 %v457
    %1026 = vmatpush1.msra.mxu0 %v456
    %1027 = vmatprep.subr.mxu0 %v461
    %1028 = vmatpush1.msra.mxu0 %v460
    %1029 = vmatprep.subr.mxu0 %v465
    %1030 = vmatpush1.msra.mxu0 %v464
    %1031 = vmatprep.subr.mxu0 %v469
    %1032 = vmatpush1.msra.mxu0 %v468
    %1033 = vmatprep.subr.mxu0 %v473
    %1034 = vmatpush1.msra.mxu0 %v472
    %1035 = vmatprep.subr.mxu0 %v477
    %1036 = vmatpush1.msra.mxu0 %v476
    %1037 = vmatprep.subr.mxu0 0.0
    %1038 = vmatpush1.msra.mxu0 0.0
    %1039 = vmatprep.subr.mxu0 0.0
    %1040 = vmatpush1.msra.mxu0 0.0
    %1041 = vmatprep.subr.mxu0 0.0
    %1042 = vmatpush1.msra.mxu0 0.0
    %1043 = vmatprep.subr.mxu0 0.0
    %1044 = vmatpush1.msra.mxu0 0.0
    %1045 = vmatprep.subr.mxu0 0.0
    %1046 = vmatpush1.msra.mxu0 0.0
    %1047 = vmatprep.subr.mxu0 0.0
    %1048 = vmatpush1.msra.mxu0 0.0
    %1049 = vmatprep.subr.mxu0 0.0
    %1050 = vmatpush1.msra.mxu0 0.0
    %1051 = vmatprep.subr.mxu0 0.0
    %1052 = vmatpush1.msra.mxu0 0.0
    %1053 = vmatprep.subr.mxu0 0.0
    %1054 = vmatpush1.msra.mxu0 0.0
    %1055 = vmatprep.subr.mxu0 0.0
    %1056 = vmatpush1.msra.mxu0 0.0
    %1057 = vmatprep.subr.mxu0 0.0
    %1058 = vmatpush1.msra.mxu0 0.0
    %1059 = vmatprep.subr.mxu0 0.0
    %1060 = vmatpush1.msra.mxu0 0.0
    %1061 = vmatprep.subr.mxu0 0.0
    %1062 = vmatpush1.msra.mxu0 0.0
    %1063 = vmatprep.subr.mxu0 0.0
    %1064 = vmatpush1.msra.mxu0 0.0
    %1065 = vmatprep.subr.mxu0 0.0
    %1066 = vmatpush1.msra.mxu0 0.0
    %1067 = vmatprep.subr.mxu0 0.0
    %1068 = vmatpush1.msra.mxu0 0.0
    %1069 = vmatprep.mubr.f32.mxu0 0.0
    %1070 = vmatmul.mubr.f32.gmra.mrb[0].mxu0 %v999
    %v1071 = vpop.f32.mrb[0].mxu0
    %v1072 = vadd.f32 0.0, %v1071
    %v1073 = vpop.f32.mrb[0].mxu0
    %v1074 = vadd.f32 0.0, %v1073
    %1075 = vdwg.mxu0
    %1076 = vmatprep.subr.mxu0 %v419
    %1077 = vmatpush1.msra.mxu0 %v418
    %1078 = vmatprep.subr.mxu0 %v423
    %1079 = vmatpush1.msra.mxu0 %v422
    %1080 = vmatprep.subr.mxu0 %v427
    %1081 = vmatpush1.msra.mxu0 %v426
    %1082 = vmatprep.subr.mxu0 %v431
    %1083 = vmatpush1.msra.mxu0 %v430
    %1084 = vmatprep.subr.mxu0 %v435
    %1085 = vmatpush1.msra.mxu0 %v434
    %1086 = vmatprep.subr.mxu0 %v439
    %1087 = vmatpush1.msra.mxu0 %v438
    %1088 = vmatprep.subr.mxu0 %v443
    %1089 = vmatpush1.msra.mxu0 %v442
    %1090 = vmatprep.subr.mxu0 %v447
    %1091 = vmatpush1.msra.mxu0 %v446
    %1092 = vmatprep.subr.mxu0 %v451
    %1093 = vmatpush1.msra.mxu0 %v450
    %1094 = vmatprep.subr.mxu0 %v455
    %1095 = vmatpush1.msra.mxu0 %v454
    %1096 = vmatprep.subr.mxu0 %v459
    %1097 = vmatpush1.msra.mxu0 %v458
    %1098 = vmatprep.subr.mxu0 %v463
    %1099 = vmatpush1.msra.mxu0 %v462
    %1100 = vmatprep.subr.mxu0 %v467
    %1101 = vmatpush1.msra.mxu0 %v466
    %1102 = vmatprep.subr.mxu0 %v471
    %1103 = vmatpush1.msra.mxu0 %v470
    %1104 = vmatprep.subr.mxu0 %v475
    %1105 = vmatpush1.msra.mxu0 %v474
    %1106 = vmatprep.subr.mxu0 %v479
    %1107 = vmatpush1.msra.mxu0 %v478
    %1108 = vmatprep.subr.mxu0 0.0
    %1109 = vmatpush1.msra.mxu0 0.0
    %1110 = vmatprep.subr.mxu0 0.0
    %1111 = vmatpush1.msra.mxu0 0.0
    %1112 = vmatprep.subr.mxu0 0.0
    %1113 = vmatpush1.msra.mxu0 0.0
    %1114 = vmatprep.subr.mxu0 0.0
    %1115 = vmatpush1.msra.mxu0 0.0
    %1116 = vmatprep.subr.mxu0 0.0
    %1117 = vmatpush1.msra.mxu0 0.0
    %1118 = vmatprep.subr.mxu0 0.0
    %1119 = vmatpush1.msra.mxu0 0.0
    %1120 = vmatprep.subr.mxu0 0.0
    %1121 = vmatpush1.msra.mxu0 0.0
    %1122 = vmatprep.subr.mxu0 0.0
    %1123 = vmatpush1.msra.mxu0 0.0
    %1124 = vmatprep.subr.mxu0 0.0
    %1125 = vmatpush1.msra.mxu0 0.0
    %1126 = vmatprep.subr.mxu0 0.0
    %1127 = vmatpush1.msra.mxu0 0.0
    %1128 = vmatprep.subr.mxu0 0.0
    %1129 = vmatpush1.msra.mxu0 0.0
    %1130 = vmatprep.subr.mxu0 0.0
    %1131 = vmatpush1.msra.mxu0 0.0
    %1132 = vmatprep.subr.mxu0 0.0
    %1133 = vmatpush1.msra.mxu0 0.0
    %1134 = vmatprep.subr.mxu0 0.0
    %1135 = vmatpush1.msra.mxu0 0.0
    %1136 = vmatprep.subr.mxu0 0.0
    %1137 = vmatpush1.msra.mxu0 0.0
    %1138 = vmatprep.subr.mxu0 0.0
    %1139 = vmatpush1.msra.mxu0 0.0
    %1140 = vmatprep.mubr.f32.mxu0 0.0
    %1141 = vmatmul.mubr.f32.gmra.mrb[0].mxu0 %v999
    %v1142 = vpop.f32.mrb[0].mxu0
    %v1143 = vadd.f32 0.0, %v1142
    %v1144 = vpop.f32.mrb[0].mxu0
    %v1145 = vadd.f32 0.0, %v1144
    %1146 = vdwg.mxu0
    %v1147 = vadd.f32 %v1001, %v1072
    %v1148 = vadd.f32 %v1002, %v1074
    %v1149 = vadd.f32 %v1003, %v1143
    %v1150 = vadd.f32 %v1004, %v1145
    %v1151 = vxor.u32 %v1147, 2147483648
    %v1152 = vmul.f32 %v1151, 1.442695
    %v1153 = vpow.pop %v1152
    %v1154 = vadd.f32 %v1153, 1.0
    %v1155 = vrcp.pop %v1154
    %v1156 = vmul.f32 1.0, %v1155
    %v1157 = vxor.u32 %v1148, 2147483648
    %v1158 = vmul.f32 %v1157, 1.442695
    %v1159 = vpow.pop %v1158
    %v1160 = vadd.f32 %v1159, 1.0
    %v1161 = vrcp.pop %v1160
    %v1162 = vmul.f32 1.0, %v1161
    %v1163 = vtanh.pop %v1149
    %v1164 = vxor.u32 %v1150, 2147483648
    %v1165 = vmul.f32 %v1164, 1.442695
    %v1166 = vpow.pop %v1165
    %v1167 = vadd.f32 %v1166, 1.0
    %v1168 = vrcp.pop %v1167
    %v1169 = vmul.f32 1.0, %v1168
    %v1170 = vmul.f32 %v1162, %v997
    %v1171 = vmul.f32 %v1156, %v1163
    %v1172 = vadd.f32 %v1170, %v1171
    %v1173 = vtanh.pop %v1172
    %v1174 = vmul.f32 %v1169, %v1173
    %s1175 = scalar_lea.vmem [#allocation2], 128
    %v1176 = vld [vmem:[%s1175] sm:$0xff]
    %v1177 = vld [vmem:[%s1175 + $0x8] sm:$0xff]
    %v1178 = vld [vmem:[%s1175 + $0x10] sm:$0xff]
    %v1179 = vld [vmem:[%s1175 + $0x18] sm:$0xff]
    %1180 = vmatprep.subr.mxu0 %v417
    %1181 = vmatpush1.msra.mxu0 %v416
    %1182 = vmatprep.subr.mxu0 %v421
    %1183 = vmatpush1.msra.mxu0 %v420
    %1184 = vmatprep.subr.mxu0 %v425
    %1185 = vmatpush1.msra.mxu0 %v424
    %1186 = vmatprep.subr.mxu0 %v429
    %1187 = vmatpush1.msra.mxu0 %v428
    %1188 = vmatprep.subr.mxu0 %v433
    %1189 = vmatpush1.msra.mxu0 %v432
    %1190 = vmatprep.subr.mxu0 %v437
    %1191 = vmatpush1.msra.mxu0 %v436
    %1192 = vmatprep.subr.mxu0 %v441
    %1193 = vmatpush1.msra.mxu0 %v440
    %1194 = vmatprep.subr.mxu0 %v445
    %1195 = vmatpush1.msra.mxu0 %v444
    %1196 = vmatprep.subr.mxu0 %v449
    %1197 = vmatpush1.msra.mxu0 %v448
    %1198 = vmatprep.subr.mxu0 %v453
    %1199 = vmatpush1.msra.mxu0 %v452
    %1200 = vmatprep.subr.mxu0 %v457
    %1201 = vmatpush1.msra.mxu0 %v456
    %1202 = vmatprep.subr.mxu0 %v461
    %1203 = vmatpush1.msra.mxu0 %v460
    %1204 = vmatprep.subr.mxu0 %v465
    %1205 = vmatpush1.msra.mxu0 %v464
    %1206 = vmatprep.subr.mxu0 %v469
    %1207 = vmatpush1.msra.mxu0 %v468
    %1208 = vmatprep.subr.mxu0 %v473
    %1209 = vmatpush1.msra.mxu0 %v472
    %1210 = vmatprep.subr.mxu0 %v477
    %1211 = vmatpush1.msra.mxu0 %v476
    %1212 = vmatprep.subr.mxu0 0.0
    %1213 = vmatpush1.msra.mxu0 0.0
    %1214 = vmatprep.subr.mxu0 0.0
    %1215 = vmatpush1.msra.mxu0 0.0
    %1216 = vmatprep.subr.mxu0 0.0
    %1217 = vmatpush1.msra.mxu0 0.0
    %1218 = vmatprep.subr.mxu0 0.0
    %1219 = vmatpush1.msra.mxu0 0.0
    %1220 = vmatprep.subr.mxu0 0.0
    %1221 = vmatpush1.msra.mxu0 0.0
    %1222 = vmatprep.subr.mxu0 0.0
    %1223 = vmatpush1.msra.mxu0 0.0
    %1224 = vmatprep.subr.mxu0 0.0
    %1225 = vmatpush1.msra.mxu0 0.0
    %1226 = vmatprep.subr.mxu0 0.0
    %1227 = vmatpush1.msra.mxu0 0.0
    %1228 = vmatprep.subr.mxu0 0.0
    %1229 = vmatpush1.msra.mxu0 0.0
    %1230 = vmatprep.subr.mxu0 0.0
    %1231 = vmatpush1.msra.mxu0 0.0
    %1232 = vmatprep.subr.mxu0 0.0
    %1233 = vmatpush1.msra.mxu0 0.0
    %1234 = vmatprep.subr.mxu0 0.0
    %1235 = vmatpush1.msra.mxu0 0.0
    %1236 = vmatprep.subr.mxu0 0.0
    %1237 = vmatpush1.msra.mxu0 0.0
    %1238 = vmatprep.subr.mxu0 0.0
    %1239 = vmatpush1.msra.mxu0 0.0
    %1240 = vmatprep.subr.mxu0 0.0
    %1241 = vmatpush1.msra.mxu0 0.0
    %1242 = vmatprep.subr.mxu0 0.0
    %1243 = vmatpush1.msra.mxu0 0.0
    %1244 = vmatprep.mubr.f32.mxu0 0.0
    %1245 = vmatmul.mubr.f32.gmra.mrb[0].mxu0 %v1174
    %v1246 = vpop.f32.mrb[0].mxu0
    %v1247 = vadd.f32 0.0, %v1246
    %v1248 = vpop.f32.mrb[0].mxu0
    %v1249 = vadd.f32 0.0, %v1248
    %1250 = vdwg.mxu0
    %1251 = vmatprep.subr.mxu0 %v419
    %1252 = vmatpush1.msra.mxu0 %v418
    %1253 = vmatprep.subr.mxu0 %v423
    %1254 = vmatpush1.msra.mxu0 %v422
    %1255 = vmatprep.subr.mxu0 %v427
    %1256 = vmatpush1.msra.mxu0 %v426
    %1257 = vmatprep.subr.mxu0 %v431
    %1258 = vmatpush1.msra.mxu0 %v430
    %1259 = vmatprep.subr.mxu0 %v435
    %1260 = vmatpush1.msra.mxu0 %v434
    %1261 = vmatprep.subr.mxu0 %v439
    %1262 = vmatpush1.msra.mxu0 %v438
    %1263 = vmatprep.subr.mxu0 %v443
    %1264 = vmatpush1.msra.mxu0 %v442
    %1265 = vmatprep.subr.mxu0 %v447
    %1266 = vmatpush1.msra.mxu0 %v446
    %1267 = vmatprep.subr.mxu0 %v451
    %1268 = vmatpush1.msra.mxu0 %v450
    %1269 = vmatprep.subr.mxu0 %v455
    %1270 = vmatpush1.msra.mxu0 %v454
    %1271 = vmatprep.subr.mxu0 %v459
    %1272 = vmatpush1.msra.mxu0 %v458
    %1273 = vmatprep.subr.mxu0 %v463
    %1274 = vmatpush1.msra.mxu0 %v462
    %1275 = vmatprep.subr.mxu0 %v467
    %1276 = vmatpush1.msra.mxu0 %v466
    %1277 = vmatprep.subr.mxu0 %v471
    %1278 = vmatpush1.msra.mxu0 %v470
    %1279 = vmatprep.subr.mxu0 %v475
    %1280 = vmatpush1.msra.mxu0 %v474
    %1281 = vmatprep.subr.mxu0 %v479
    %1282 = vmatpush1.msra.mxu0 %v478
    %1283 = vmatprep.subr.mxu0 0.0
    %1284 = vmatpush1.msra.mxu0 0.0
    %1285 = vmatprep.subr.mxu0 0.0
    %1286 = vmatpush1.msra.mxu0 0.0
    %1287 = vmatprep.subr.mxu0 0.0
    %1288 = vmatpush1.msra.mxu0 0.0
    %1289 = vmatprep.subr.mxu0 0.0
    %1290 = vmatpush1.msra.mxu0 0.0
    %1291 = vmatprep.subr.mxu0 0.0
    %1292 = vmatpush1.msra.mxu0 0.0
    %1293 = vmatprep.subr.mxu0 0.0
    %1294 = vmatpush1.msra.mxu0 0.0
    %1295 = vmatprep.subr.mxu0 0.0
    %1296 = vmatpush1.msra.mxu0 0.0
    %1297 = vmatprep.subr.mxu0 0.0
    %1298 = vmatpush1.msra.mxu0 0.0
    %1299 = vmatprep.subr.mxu0 0.0
    %1300 = vmatpush1.msra.mxu0 0.0
    %1301 = vmatprep.subr.mxu0 0.0
    %1302 = vmatpush1.msra.mxu0 0.0
    %1303 = vmatprep.subr.mxu0 0.0
    %1304 = vmatpush1.msra.mxu0 0.0
    %1305 = vmatprep.subr.mxu0 0.0
    %1306 = vmatpush1.msra.mxu0 0.0
    %1307 = vmatprep.subr.mxu0 0.0
    %1308 = vmatpush1.msra.mxu0 0.0
    %1309 = vmatprep.subr.mxu0 0.0
    %1310 = vmatpush1.msra.mxu0 0.0
    %1311 = vmatprep.subr.mxu0 0.0
    %1312 = vmatpush1.msra.mxu0 0.0
    %1313 = vmatprep.subr.mxu0 0.0
    %1314 = vmatpush1.msra.mxu0 0.0
    %1315 = vmatprep.mubr.f32.mxu0 0.0
    %1316 = vmatmul.mubr.f32.gmra.mrb[0].mxu0 %v1174
    %v1317 = vpop.f32.mrb[0].mxu0
    %v1318 = vadd.f32 0.0, %v1317
    %v1319 = vpop.f32.mrb[0].mxu0
    %v1320 = vadd.f32 0.0, %v1319
    %1321 = vdwg.mxu0
    %v1322 = vadd.f32 %v1176, %v1247
    %v1323 = vadd.f32 %v1177, %v1249
    %v1324 = vadd.f32 %v1178, %v1318
    %v1325 = vadd.f32 %v1179, %v1320
    %v1326 = vxor.u32 %v1322, 2147483648
    %v1327 = vmul.f32 %v1326, 1.442695
    %v1328 = vpow.pop %v1327
    %v1329 = vadd.f32 %v1328, 1.0
    %v1330 = vrcp.pop %v1329
    %v1331 = vmul.f32 1.0, %v1330
    %v1332 = vxor.u32 %v1323, 2147483648
    %v1333 = vmul.f32 %v1332, 1.442695
    %v1334 = vpow.pop %v1333
    %v1335 = vadd.f32 %v1334, 1.0
    %v1336 = vrcp.pop %v1335
    %v1337 = vmul.f32 1.0, %v1336
    %v1338 = vtanh.pop %v1324
    %v1339 = vxor.u32 %v1325, 2147483648
    %v1340 = vmul.f32 %v1339, 1.442695
    %v1341 = vpow.pop %v1340
    %v1342 = vadd.f32 %v1341, 1.0
    %v1343 = vrcp.pop %v1342
    %v1344 = vmul.f32 1.0, %v1343
    %v1345 = vmul.f32 %v1337, %v1172
    %v1346 = vmul.f32 %v1331, %v1338
    %v1347 = vadd.f32 %v1345, %v1346
    %v1348 = vtanh.pop %v1347
    %v1349 = vmul.f32 %v1344, %v1348
    %s1350 = scalar_lea.vmem [#allocation2], 160
    %v1351 = vld [vmem:[%s1350] sm:$0xff]
    %v1352 = vld [vmem:[%s1350 + $0x8] sm:$0xff]
    %v1353 = vld [vmem:[%s1350 + $0x10] sm:$0xff]
    %v1354 = vld [vmem:[%s1350 + $0x18] sm:$0xff]
    %1355 = vmatprep.subr.mxu0 %v417
    %1356 = vmatpush1.msra.mxu0 %v416
    %1357 = vmatprep.subr.mxu0 %v421
    %1358 = vmatpush1.msra.mxu0 %v420
    %1359 = vmatprep.subr.mxu0 %v425
    %1360 = vmatpush1.msra.mxu0 %v424
    %1361 = vmatprep.subr.mxu0 %v429
    %1362 = vmatpush1.msra.mxu0 %v428
    %1363 = vmatprep.subr.mxu0 %v433
    %1364 = vmatpush1.msra.mxu0 %v432
    %1365 = vmatprep.subr.mxu0 %v437
    %1366 = vmatpush1.msra.mxu0 %v436
    %1367 = vmatprep.subr.mxu0 %v441
    %1368 = vmatpush1.msra.mxu0 %v440
    %1369 = vmatprep.subr.mxu0 %v445
    %1370 = vmatpush1.msra.mxu0 %v444
    %1371 = vmatprep.subr.mxu0 %v449
    %1372 = vmatpush1.msra.mxu0 %v448
    %1373 = vmatprep.subr.mxu0 %v453
    %1374 = vmatpush1.msra.mxu0 %v452
    %1375 = vmatprep.subr.mxu0 %v457
    %1376 = vmatpush1.msra.mxu0 %v456
    %1377 = vmatprep.subr.mxu0 %v461
    %1378 = vmatpush1.msra.mxu0 %v460
    %1379 = vmatprep.subr.mxu0 %v465
    %1380 = vmatpush1.msra.mxu0 %v464
    %1381 = vmatprep.subr.mxu0 %v469
    %1382 = vmatpush1.msra.mxu0 %v468
    %1383 = vmatprep.subr.mxu0 %v473
    %1384 = vmatpush1.msra.mxu0 %v472
    %1385 = vmatprep.subr.mxu0 %v477
    %1386 = vmatpush1.msra.mxu0 %v476
    %1387 = vmatprep.subr.mxu0 0.0
    %1388 = vmatpush1.msra.mxu0 0.0
    %1389 = vmatprep.subr.mxu0 0.0
    %1390 = vmatpush1.msra.mxu0 0.0
    %1391 = vmatprep.subr.mxu0 0.0
    %1392 = vmatpush1.msra.mxu0 0.0
    %1393 = vmatprep.subr.mxu0 0.0
    %1394 = vmatpush1.msra.mxu0 0.0
    %1395 = vmatprep.subr.mxu0 0.0
    %1396 = vmatpush1.msra.mxu0 0.0
    %1397 = vmatprep.subr.mxu0 0.0
    %1398 = vmatpush1.msra.mxu0 0.0
    %1399 = vmatprep.subr.mxu0 0.0
    %1400 = vmatpush1.msra.mxu0 0.0
    %1401 = vmatprep.subr.mxu0 0.0
    %1402 = vmatpush1.msra.mxu0 0.0
    %1403 = vmatprep.subr.mxu0 0.0
    %1404 = vmatpush1.msra.mxu0 0.0
    %1405 = vmatprep.subr.mxu0 0.0
    %1406 = vmatpush1.msra.mxu0 0.0
    %1407 = vmatprep.subr.mxu0 0.0
    %1408 = vmatpush1.msra.mxu0 0.0
    %1409 = vmatprep.subr.mxu0 0.0
    %1410 = vmatpush1.msra.mxu0 0.0
    %1411 = vmatprep.subr.mxu0 0.0
    %1412 = vmatpush1.msra.mxu0 0.0
    %1413 = vmatprep.subr.mxu0 0.0
    %1414 = vmatpush1.msra.mxu0 0.0
    %1415 = vmatprep.subr.mxu0 0.0
    %1416 = vmatpush1.msra.mxu0 0.0
    %1417 = vmatprep.subr.mxu0 0.0
    %1418 = vmatpush1.msra.mxu0 0.0
    %1419 = vmatprep.mubr.f32.mxu0 0.0
    %1420 = vmatmul.mubr.f32.gmra.mrb[0].mxu0 %v1349
    %v1421 = vpop.f32.mrb[0].mxu0
    %v1422 = vadd.f32 0.0, %v1421
    %v1423 = vpop.f32.mrb[0].mxu0
    %v1424 = vadd.f32 0.0, %v1423
    %1425 = vdwg.mxu0
    %1426 = vmatprep.subr.mxu0 %v419
    %1427 = vmatpush1.msra.mxu0 %v418
    %1428 = vmatprep.subr.mxu0 %v423
    %1429 = vmatpush1.msra.mxu0 %v422
    %1430 = vmatprep.subr.mxu0 %v427
    %1431 = vmatpush1.msra.mxu0 %v426
    %1432 = vmatprep.subr.mxu0 %v431
    %1433 = vmatpush1.msra.mxu0 %v430
    %1434 = vmatprep.subr.mxu0 %v435
    %1435 = vmatpush1.msra.mxu0 %v434
    %1436 = vmatprep.subr.mxu0 %v439
    %1437 = vmatpush1.msra.mxu0 %v438
    %1438 = vmatprep.subr.mxu0 %v443
    %1439 = vmatpush1.msra.mxu0 %v442
    %1440 = vmatprep.subr.mxu0 %v447
    %1441 = vmatpush1.msra.mxu0 %v446
    %1442 = vmatprep.subr.mxu0 %v451
    %1443 = vmatpush1.msra.mxu0 %v450
    %1444 = vmatprep.subr.mxu0 %v455
    %1445 = vmatpush1.msra.mxu0 %v454
    %1446 = vmatprep.subr.mxu0 %v459
    %1447 = vmatpush1.msra.mxu0 %v458
    %1448 = vmatprep.subr.mxu0 %v463
    %1449 = vmatpush1.msra.mxu0 %v462
    %1450 = vmatprep.subr.mxu0 %v467
    %1451 = vmatpush1.msra.mxu0 %v466
    %1452 = vmatprep.subr.mxu0 %v471
    %1453 = vmatpush1.msra.mxu0 %v470
    %1454 = vmatprep.subr.mxu0 %v475
    %1455 = vmatpush1.msra.mxu0 %v474
    %1456 = vmatprep.subr.mxu0 %v479
    %1457 = vmatpush1.msra.mxu0 %v478
    %1458 = vmatprep.subr.mxu0 0.0
    %1459 = vmatpush1.msra.mxu0 0.0
    %1460 = vmatprep.subr.mxu0 0.0
    %1461 = vmatpush1.msra.mxu0 0.0
    %1462 = vmatprep.subr.mxu0 0.0
    %1463 = vmatpush1.msra.mxu0 0.0
    %1464 = vmatprep.subr.mxu0 0.0
    %1465 = vmatpush1.msra.mxu0 0.0
    %1466 = vmatprep.subr.mxu0 0.0
    %1467 = vmatpush1.msra.mxu0 0.0
    %1468 = vmatprep.subr.mxu0 0.0
    %1469 = vmatpush1.msra.mxu0 0.0
    %1470 = vmatprep.subr.mxu0 0.0
    %1471 = vmatpush1.msra.mxu0 0.0
    %1472 = vmatprep.subr.mxu0 0.0
    %1473 = vmatpush1.msra.mxu0 0.0
    %1474 = vmatprep.subr.mxu0 0.0
    %1475 = vmatpush1.msra.mxu0 0.0
    %1476 = vmatprep.subr.mxu0 0.0
    %1477 = vmatpush1.msra.mxu0 0.0
    %1478 = vmatprep.subr.mxu0 0.0
    %1479 = vmatpush1.msra.mxu0 0.0
    %1480 = vmatprep.subr.mxu0 0.0
    %1481 = vmatpush1.msra.mxu0 0.0
    %1482 = vmatprep.subr.mxu0 0.0
    %1483 = vmatpush1.msra.mxu0 0.0
    %1484 = vmatprep.subr.mxu0 0.0
    %1485 = vmatpush1.msra.mxu0 0.0
    %1486 = vmatprep.subr.mxu0 0.0
    %1487 = vmatpush1.msra.mxu0 0.0
    %1488 = vmatprep.subr.mxu0 0.0
    %1489 = vmatpush1.msra.mxu0 0.0
    %1490 = vmatprep.mubr.f32.mxu0 0.0
    %1491 = vmatmul.mubr.f32.gmra.mrb[0].mxu0 %v1349
    %v1492 = vpop.f32.mrb[0].mxu0
    %v1493 = vadd.f32 0.0, %v1492
    %v1494 = vpop.f32.mrb[0].mxu0
    %v1495 = vadd.f32 0.0, %v1494
    %1496 = vdwg.mxu0
    %v1497 = vadd.f32 %v1351, %v1422
    %v1498 = vadd.f32 %v1352, %v1424
    %v1499 = vadd.f32 %v1353, %v1493
    %v1500 = vadd.f32 %v1354, %v1495
    %v1501 = vxor.u32 %v1497, 2147483648
    %v1502 = vmul.f32 %v1501, 1.442695
    %v1503 = vpow.pop %v1502
    %v1504 = vadd.f32 %v1503, 1.0
    %v1505 = vrcp.pop %v1504
    %v1506 = vmul.f32 1.0, %v1505
    %v1507 = vxor.u32 %v1498, 2147483648
    %v1508 = vmul.f32 %v1507, 1.442695
    %v1509 = vpow.pop %v1508
    %v1510 = vadd.f32 %v1509, 1.0
    %v1511 = vrcp.pop %v1510
    %v1512 = vmul.f32 1.0, %v1511
    %v1513 = vtanh.pop %v1499
    %v1514 = vxor.u32 %v1500, 2147483648
    %v1515 = vmul.f32 %v1514, 1.442695
    %v1516 = vpow.pop %v1515
    %v1517 = vadd.f32 %v1516, 1.0
    %v1518 = vrcp.pop %v1517
    %v1519 = vmul.f32 1.0, %v1518
    %v1520 = vmul.f32 %v1512, %v1347
    %v1521 = vmul.f32 %v1506, %v1513
    %v1522 = vadd.f32 %v1520, %v1521
    %v1523 = vtanh.pop %v1522
    %v1524 = vmul.f32 %v1519, %v1523
    %s1525 = scalar_lea.vmem [#allocation2], 192
    %v1526 = vld [vmem:[%s1525] sm:$0xff]
    %v1527 = vld [vmem:[%s1525 + $0x8] sm:$0xff]
    %v1528 = vld [vmem:[%s1525 + $0x10] sm:$0xff]
    %v1529 = vld [vmem:[%s1525 + $0x18] sm:$0xff]
    %1530 = vmatprep.subr.mxu0 %v417
    %1531 = vmatpush1.msra.mxu0 %v416
    %1532 = vmatprep.subr.mxu0 %v421
    %1533 = vmatpush1.msra.mxu0 %v420
    %1534 = vmatprep.subr.mxu0 %v425
    %1535 = vmatpush1.msra.mxu0 %v424
    %1536 = vmatprep.subr.mxu0 %v429
    %1537 = vmatpush1.msra.mxu0 %v428
    %1538 = vmatprep.subr.mxu0 %v433
    %1539 = vmatpush1.msra.mxu0 %v432
    %1540 = vmatprep.subr.mxu0 %v437
    %1541 = vmatpush1.msra.mxu0 %v436
    %1542 = vmatprep.subr.mxu0 %v441
    %1543 = vmatpush1.msra.mxu0 %v440
    %1544 = vmatprep.subr.mxu0 %v445
    %1545 = vmatpush1.msra.mxu0 %v444
    %1546 = vmatprep.subr.mxu0 %v449
    %1547 = vmatpush1.msra.mxu0 %v448
    %1548 = vmatprep.subr.mxu0 %v453
    %1549 = vmatpush1.msra.mxu0 %v452
    %1550 = vmatprep.subr.mxu0 %v457
    %1551 = vmatpush1.msra.mxu0 %v456
    %1552 = vmatprep.subr.mxu0 %v461
    %1553 = vmatpush1.msra.mxu0 %v460
    %1554 = vmatprep.subr.mxu0 %v465
    %1555 = vmatpush1.msra.mxu0 %v464
    %1556 = vmatprep.subr.mxu0 %v469
    %1557 = vmatpush1.msra.mxu0 %v468
    %1558 = vmatprep.subr.mxu0 %v473
    %1559 = vmatpush1.msra.mxu0 %v472
    %1560 = vmatprep.subr.mxu0 %v477
    %1561 = vmatpush1.msra.mxu0 %v476
    %1562 = vmatprep.subr.mxu0 0.0
    %1563 = vmatpush1.msra.mxu0 0.0
    %1564 = vmatprep.subr.mxu0 0.0
    %1565 = vmatpush1.msra.mxu0 0.0
    %1566 = vmatprep.subr.mxu0 0.0
    %1567 = vmatpush1.msra.mxu0 0.0
    %1568 = vmatprep.subr.mxu0 0.0
    %1569 = vmatpush1.msra.mxu0 0.0
    %1570 = vmatprep.subr.mxu0 0.0
    %1571 = vmatpush1.msra.mxu0 0.0
    %1572 = vmatprep.subr.mxu0 0.0
    %1573 = vmatpush1.msra.mxu0 0.0
    %1574 = vmatprep.subr.mxu0 0.0
    %1575 = vmatpush1.msra.mxu0 0.0
    %1576 = vmatprep.subr.mxu0 0.0
    %1577 = vmatpush1.msra.mxu0 0.0
    %1578 = vmatprep.subr.mxu0 0.0
    %1579 = vmatpush1.msra.mxu0 0.0
    %1580 = vmatprep.subr.mxu0 0.0
    %1581 = vmatpush1.msra.mxu0 0.0
    %1582 = vmatprep.subr.mxu0 0.0
    %1583 = vmatpush1.msra.mxu0 0.0
    %1584 = vmatprep.subr.mxu0 0.0
    %1585 = vmatpush1.msra.mxu0 0.0
    %1586 = vmatprep.subr.mxu0 0.0
    %1587 = vmatpush1.msra.mxu0 0.0
    %1588 = vmatprep.subr.mxu0 0.0
    %1589 = vmatpush1.msra.mxu0 0.0
    %1590 = vmatprep.subr.mxu0 0.0
    %1591 = vmatpush1.msra.mxu0 0.0
    %1592 = vmatprep.subr.mxu0 0.0
    %1593 = vmatpush1.msra.mxu0 0.0
    %1594 = vmatprep.mubr.f32.mxu0 0.0
    %1595 = vmatmul.mubr.f32.gmra.mrb[0].mxu0 %v1524
    %v1596 = vpop.f32.mrb[0].mxu0
    %v1597 = vadd.f32 0.0, %v1596
    %v1598 = vpop.f32.mrb[0].mxu0
    %v1599 = vadd.f32 0.0, %v1598
    %1600 = vdwg.mxu0
    %1601 = vmatprep.subr.mxu0 %v419
    %1602 = vmatpush1.msra.mxu0 %v418
    %1603 = vmatprep.subr.mxu0 %v423
    %1604 = vmatpush1.msra.mxu0 %v422
    %1605 = vmatprep.subr.mxu0 %v427
    %1606 = vmatpush1.msra.mxu0 %v426
    %1607 = vmatprep.subr.mxu0 %v431
    %1608 = vmatpush1.msra.mxu0 %v430
    %1609 = vmatprep.subr.mxu0 %v435
    %1610 = vmatpush1.msra.mxu0 %v434
    %1611 = vmatprep.subr.mxu0 %v439
    %1612 = vmatpush1.msra.mxu0 %v438
    %1613 = vmatprep.subr.mxu0 %v443
    %1614 = vmatpush1.msra.mxu0 %v442
    %1615 = vmatprep.subr.mxu0 %v447
    %1616 = vmatpush1.msra.mxu0 %v446
    %1617 = vmatprep.subr.mxu0 %v451
    %1618 = vmatpush1.msra.mxu0 %v450
    %1619 = vmatprep.subr.mxu0 %v455
    %1620 = vmatpush1.msra.mxu0 %v454
    %1621 = vmatprep.subr.mxu0 %v459
    %1622 = vmatpush1.msra.mxu0 %v458
    %1623 = vmatprep.subr.mxu0 %v463
    %1624 = vmatpush1.msra.mxu0 %v462
    %1625 = vmatprep.subr.mxu0 %v467
    %1626 = vmatpush1.msra.mxu0 %v466
    %1627 = vmatprep.subr.mxu0 %v471
    %1628 = vmatpush1.msra.mxu0 %v470
    %1629 = vmatprep.subr.mxu0 %v475
    %1630 = vmatpush1.msra.mxu0 %v474
    %1631 = vmatprep.subr.mxu0 %v479
    %1632 = vmatpush1.msra.mxu0 %v478
    %1633 = vmatprep.subr.mxu0 0.0
    %1634 = vmatpush1.msra.mxu0 0.0
    %1635 = vmatprep.subr.mxu0 0.0
    %1636 = vmatpush1.msra.mxu0 0.0
    %1637 = vmatprep.subr.mxu0 0.0
    %1638 = vmatpush1.msra.mxu0 0.0
    %1639 = vmatprep.subr.mxu0 0.0
    %1640 = vmatpush1.msra.mxu0 0.0
    %1641 = vmatprep.subr.mxu0 0.0
    %1642 = vmatpush1.msra.mxu0 0.0
    %1643 = vmatprep.subr.mxu0 0.0
    %1644 = vmatpush1.msra.mxu0 0.0
    %1645 = vmatprep.subr.mxu0 0.0
    %1646 = vmatpush1.msra.mxu0 0.0
    %1647 = vmatprep.subr.mxu0 0.0
    %1648 = vmatpush1.msra.mxu0 0.0
    %1649 = vmatprep.subr.mxu0 0.0
    %1650 = vmatpush1.msra.mxu0 0.0
    %1651 = vmatprep.subr.mxu0 0.0
    %1652 = vmatpush1.msra.mxu0 0.0
    %1653 = vmatprep.subr.mxu0 0.0
    %1654 = vmatpush1.msra.mxu0 0.0
    %1655 = vmatprep.subr.mxu0 0.0
    %1656 = vmatpush1.msra.mxu0 0.0
    %1657 = vmatprep.subr.mxu0 0.0
    %1658 = vmatpush1.msra.mxu0 0.0
    %1659 = vmatprep.subr.mxu0 0.0
    %1660 = vmatpush1.msra.mxu0 0.0
    %1661 = vmatprep.subr.mxu0 0.0
    %1662 = vmatpush1.msra.mxu0 0.0
    %1663 = vmatprep.subr.mxu0 0.0
    %1664 = vmatpush1.msra.mxu0 0.0
    %1665 = vmatprep.mubr.f32.mxu0 0.0
    %1666 = vmatmul.mubr.f32.gmra.mrb[0].mxu0 %v1524
    %v1667 = vpop.f32.mrb[0].mxu0
    %v1668 = vadd.f32 0.0, %v1667
    %v1669 = vpop.f32.mrb[0].mxu0
    %v1670 = vadd.f32 0.0, %v1669
    %1671 = vdwg.mxu0
    %v1672 = vadd.f32 %v1526, %v1597
    %v1673 = vadd.f32 %v1527, %v1599
    %v1674 = vadd.f32 %v1528, %v1668
    %v1675 = vadd.f32 %v1529, %v1670
    %v1676 = vxor.u32 %v1672, 2147483648
    %v1677 = vmul.f32 %v1676, 1.442695
    %v1678 = vpow.pop %v1677
    %v1679 = vadd.f32 %v1678, 1.0
    %v1680 = vrcp.pop %v1679
    %v1681 = vmul.f32 1.0, %v1680
    %v1682 = vxor.u32 %v1673, 2147483648
    %v1683 = vmul.f32 %v1682, 1.442695
    %v1684 = vpow.pop %v1683
    %v1685 = vadd.f32 %v1684, 1.0
    %v1686 = vrcp.pop %v1685
    %v1687 = vmul.f32 1.0, %v1686
    %v1688 = vtanh.pop %v1674
    %v1689 = vxor.u32 %v1675, 2147483648
    %v1690 = vmul.f32 %v1689, 1.442695
    %v1691 = vpow.pop %v1690
    %v1692 = vadd.f32 %v1691, 1.0
    %v1693 = vrcp.pop %v1692
    %v1694 = vmul.f32 1.0, %v1693
    %v1695 = vmul.f32 %v1687, %v1522
    %v1696 = vmul.f32 %v1681, %v1688
    %v1697 = vadd.f32 %v1695, %v1696
    %v1698 = vtanh.pop %v1697
    %v1699 = vmul.f32 %v1694, %v1698
    %s1700 = scalar_lea.vmem [#allocation2], 224
    %v1701 = vld [vmem:[%s1700] sm:$0xff]
    %v1702 = vld [vmem:[%s1700 + $0x8] sm:$0xff]
    %v1703 = vld [vmem:[%s1700 + $0x10] sm:$0xff]
    %v1704 = vld [vmem:[%s1700 + $0x18] sm:$0xff]
    %1705 = vmatprep.subr.mxu0 %v417
    %1706 = vmatpush1.msra.mxu0 %v416
    %1707 = vmatprep.subr.mxu0 %v421
    %1708 = vmatpush1.msra.mxu0 %v420
    %1709 = vmatprep.subr.mxu0 %v425
    %1710 = vmatpush1.msra.mxu0 %v424
    %1711 = vmatprep.subr.mxu0 %v429
    %1712 = vmatpush1.msra.mxu0 %v428
    %1713 = vmatprep.subr.mxu0 %v433
    %1714 = vmatpush1.msra.mxu0 %v432
    %1715 = vmatprep.subr.mxu0 %v437
    %1716 = vmatpush1.msra.mxu0 %v436
    %1717 = vmatprep.subr.mxu0 %v441
    %1718 = vmatpush1.msra.mxu0 %v440
    %1719 = vmatprep.subr.mxu0 %v445
    %1720 = vmatpush1.msra.mxu0 %v444
    %1721 = vmatprep.subr.mxu0 %v449
    %1722 = vmatpush1.msra.mxu0 %v448
    %1723 = vmatprep.subr.mxu0 %v453
    %1724 = vmatpush1.msra.mxu0 %v452
    %1725 = vmatprep.subr.mxu0 %v457
    %1726 = vmatpush1.msra.mxu0 %v456
    %1727 = vmatprep.subr.mxu0 %v461
    %1728 = vmatpush1.msra.mxu0 %v460
    %1729 = vmatprep.subr.mxu0 %v465
    %1730 = vmatpush1.msra.mxu0 %v464
    %1731 = vmatprep.subr.mxu0 %v469
    %1732 = vmatpush1.msra.mxu0 %v468
    %1733 = vmatprep.subr.mxu0 %v473
    %1734 = vmatpush1.msra.mxu0 %v472
    %1735 = vmatprep.subr.mxu0 %v477
    %1736 = vmatpush1.msra.mxu0 %v476
    %1737 = vmatprep.subr.mxu0 0.0
    %1738 = vmatpush1.msra.mxu0 0.0
    %1739 = vmatprep.subr.mxu0 0.0
    %1740 = vmatpush1.msra.mxu0 0.0
    %1741 = vmatprep.subr.mxu0 0.0
    %1742 = vmatpush1.msra.mxu0 0.0
    %1743 = vmatprep.subr.mxu0 0.0
    %1744 = vmatpush1.msra.mxu0 0.0
    %1745 = vmatprep.subr.mxu0 0.0
    %1746 = vmatpush1.msra.mxu0 0.0
    %1747 = vmatprep.subr.mxu0 0.0
    %1748 = vmatpush1.msra.mxu0 0.0
    %1749 = vmatprep.subr.mxu0 0.0
    %1750 = vmatpush1.msra.mxu0 0.0
    %1751 = vmatprep.subr.mxu0 0.0
    %1752 = vmatpush1.msra.mxu0 0.0
    %1753 = vmatprep.subr.mxu0 0.0
    %1754 = vmatpush1.msra.mxu0 0.0
    %1755 = vmatprep.subr.mxu0 0.0
    %1756 = vmatpush1.msra.mxu0 0.0
    %1757 = vmatprep.subr.mxu0 0.0
    %1758 = vmatpush1.msra.mxu0 0.0
    %1759 = vmatprep.subr.mxu0 0.0
    %1760 = vmatpush1.msra.mxu0 0.0
    %1761 = vmatprep.subr.mxu0 0.0
    %1762 = vmatpush1.msra.mxu0 0.0
    %1763 = vmatprep.subr.mxu0 0.0
    %1764 = vmatpush1.msra.mxu0 0.0
    %1765 = vmatprep.subr.mxu0 0.0
    %1766 = vmatpush1.msra.mxu0 0.0
    %1767 = vmatprep.subr.mxu0 0.0
    %1768 = vmatpush1.msra.mxu0 0.0
    %1769 = vmatprep.mubr.f32.mxu0 0.0
    %1770 = vmatmul.mubr.f32.gmra.mrb[0].mxu0 %v1699
    %v1771 = vpop.f32.mrb[0].mxu0
    %v1772 = vadd.f32 0.0, %v1771
    %v1773 = vpop.f32.mrb[0].mxu0
    %v1774 = vadd.f32 0.0, %v1773
    %1775 = vdwg.mxu0
    %1776 = vmatprep.subr.mxu0 %v419
    %1777 = vmatpush1.msra.mxu0 %v418
    %1778 = vmatprep.subr.mxu0 %v423
    %1779 = vmatpush1.msra.mxu0 %v422
    %1780 = vmatprep.subr.mxu0 %v427
    %1781 = vmatpush1.msra.mxu0 %v426
    %1782 = vmatprep.subr.mxu0 %v431
    %1783 = vmatpush1.msra.mxu0 %v430
    %1784 = vmatprep.subr.mxu0 %v435
    %1785 = vmatpush1.msra.mxu0 %v434
    %1786 = vmatprep.subr.mxu0 %v439
    %1787 = vmatpush1.msra.mxu0 %v438
    %1788 = vmatprep.subr.mxu0 %v443
    %1789 = vmatpush1.msra.mxu0 %v442
    %1790 = vmatprep.subr.mxu0 %v447
    %1791 = vmatpush1.msra.mxu0 %v446
    %1792 = vmatprep.subr.mxu0 %v451
    %1793 = vmatpush1.msra.mxu0 %v450
    %1794 = vmatprep.subr.mxu0 %v455
    %1795 = vmatpush1.msra.mxu0 %v454
    %1796 = vmatprep.subr.mxu0 %v459
    %1797 = vmatpush1.msra.mxu0 %v458
    %1798 = vmatprep.subr.mxu0 %v463
    %1799 = vmatpush1.msra.mxu0 %v462
    %1800 = vmatprep.subr.mxu0 %v467
    %1801 = vmatpush1.msra.mxu0 %v466
    %1802 = vmatprep.subr.mxu0 %v471
    %1803 = vmatpush1.msra.mxu0 %v470
    %1804 = vmatprep.subr.mxu0 %v475
    %1805 = vmatpush1.msra.mxu0 %v474
    %1806 = vmatprep.subr.mxu0 %v479
    %1807 = vmatpush1.msra.mxu0 %v478
    %1808 = vmatprep.subr.mxu0 0.0
    %1809 = vmatpush1.msra.mxu0 0.0
    %1810 = vmatprep.subr.mxu0 0.0
    %1811 = vmatpush1.msra.mxu0 0.0
    %1812 = vmatprep.subr.mxu0 0.0
    %1813 = vmatpush1.msra.mxu0 0.0
    %1814 = vmatprep.subr.mxu0 0.0
    %1815 = vmatpush1.msra.mxu0 0.0
    %1816 = vmatprep.subr.mxu0 0.0
    %1817 = vmatpush1.msra.mxu0 0.0
    %1818 = vmatprep.subr.mxu0 0.0
    %1819 = vmatpush1.msra.mxu0 0.0
    %1820 = vmatprep.subr.mxu0 0.0
    %1821 = vmatpush1.msra.mxu0 0.0
    %1822 = vmatprep.subr.mxu0 0.0
    %1823 = vmatpush1.msra.mxu0 0.0
    %1824 = vmatprep.subr.mxu0 0.0
    %1825 = vmatpush1.msra.mxu0 0.0
    %1826 = vmatprep.subr.mxu0 0.0
    %1827 = vmatpush1.msra.mxu0 0.0
    %1828 = vmatprep.subr.mxu0 0.0
    %1829 = vmatpush1.msra.mxu0 0.0
    %1830 = vmatprep.subr.mxu0 0.0
    %1831 = vmatpush1.msra.mxu0 0.0
    %1832 = vmatprep.subr.mxu0 0.0
    %1833 = vmatpush1.msra.mxu0 0.0
    %1834 = vmatprep.subr.mxu0 0.0
    %1835 = vmatpush1.msra.mxu0 0.0
    %1836 = vmatprep.subr.mxu0 0.0
    %1837 = vmatpush1.msra.mxu0 0.0
    %1838 = vmatprep.subr.mxu0 0.0
    %1839 = vmatpush1.msra.mxu0 0.0
    %1840 = vmatprep.mubr.f32.mxu0 0.0
    %1841 = vmatmul.mubr.f32.gmra.mrb[0].mxu0 %v1699
    %v1842 = vpop.f32.mrb[0].mxu0
    %v1843 = vadd.f32 0.0, %v1842
    %v1844 = vpop.f32.mrb[0].mxu0
    %v1845 = vadd.f32 0.0, %v1844
    %1846 = vdwg.mxu0
    %v1847 = vadd.f32 %v1701, %v1772
    %v1848 = vadd.f32 %v1702, %v1774
    %v1849 = vadd.f32 %v1703, %v1843
    %v1850 = vadd.f32 %v1704, %v1845
    %v1851 = vxor.u32 %v1847, 2147483648
    %v1852 = vmul.f32 %v1851, 1.442695
    %v1853 = vpow.pop %v1852
    %v1854 = vadd.f32 %v1853, 1.0
    %v1855 = vrcp.pop %v1854
    %v1856 = vmul.f32 1.0, %v1855
    %v1857 = vxor.u32 %v1848, 2147483648
    %v1858 = vmul.f32 %v1857, 1.442695
    %v1859 = vpow.pop %v1858
    %v1860 = vadd.f32 %v1859, 1.0
    %v1861 = vrcp.pop %v1860
    %v1862 = vmul.f32 1.0, %v1861
    %v1863 = vtanh.pop %v1849
    %v1864 = vxor.u32 %v1850, 2147483648
    %v1865 = vmul.f32 %v1864, 1.442695
    %v1866 = vpow.pop %v1865
    %v1867 = vadd.f32 %v1866, 1.0
    %v1868 = vrcp.pop %v1867
    %v1869 = vmul.f32 1.0, %v1868
    %v1870 = vmul.f32 %v1862, %v1697
    %v1871 = vmul.f32 %v1856, %v1863
    %v1872 = vadd.f32 %v1870, %v1871
    %v1873 = vtanh.pop %v1872
    %v1874 = vmul.f32 %v1869, %v1873
    %v1875 = vld [vmem:[#allocation6] sm:$0xff]
    %v1876 = vld [vmem:[#allocation6 + $0x8] sm:$0xff]
    %v1877 = vld [vmem:[#allocation6 + $0x10] sm:$0xff]
    %v1878 = vld [vmem:[#allocation6 + $0x18] sm:$0xff]
    %v1879 = vld [vmem:[#allocation6 + $0x20] sm:$0xff]
    %v1880 = vld [vmem:[#allocation6 + $0x28] sm:$0xff]
    %v1881 = vld [vmem:[#allocation6 + $0x30] sm:$0xff]
    %v1882 = vld [vmem:[#allocation6 + $0x38] sm:$0xff]
    %v1883 = vld [vmem:[#allocation6 + $0x40] sm:$0xff]
    %v1884 = vld [vmem:[#allocation6 + $0x48] sm:$0xff]
    %v1885 = vld [vmem:[#allocation6 + $0x50] sm:$0xff]
    %v1886 = vld [vmem:[#allocation6 + $0x58] sm:$0xff]
    %v1887 = vld [vmem:[#allocation6 + $0x60] sm:$0xff]
    %v1888 = vld [vmem:[#allocation6 + $0x68] sm:$0xff]
    %v1889 = vld [vmem:[#allocation6 + $0x70] sm:$0xff]
    %v1890 = vld [vmem:[#allocation6 + $0x78] sm:$0xff]
    %v1891 = vld [vmem:[%s5] sm:$0x1]
    %v1893 = vlaneseq
    %v1894 = vshrl.u32 %v1893, 7
    %v1895 = vsub.s32 0, %v1894
    %v1896 = vrot.slane %v1891, %v1895
    %1898 = vmatprep.subr.mxu0 0.0
    %1899 = vmatpush1.msra.mxu0 %v1875
    %1900 = vmatprep.subr.mxu0 0.0
    %1901 = vmatpush1.msra.mxu0 %v1876
    %1902 = vmatprep.subr.mxu0 0.0
    %1903 = vmatpush1.msra.mxu0 %v1877
    %1904 = vmatprep.subr.mxu0 0.0
    %1905 = vmatpush1.msra.mxu0 %v1878
    %1906 = vmatprep.subr.mxu0 0.0
    %1907 = vmatpush1.msra.mxu0 %v1879
    %1908 = vmatprep.subr.mxu0 0.0
    %1909 = vmatpush1.msra.mxu0 %v1880
    %1910 = vmatprep.subr.mxu0 0.0
    %1911 = vmatpush1.msra.mxu0 %v1881
    %1912 = vmatprep.subr.mxu0 0.0
    %1913 = vmatpush1.msra.mxu0 %v1882
    %1914 = vmatprep.subr.mxu0 0.0
    %1915 = vmatpush1.msra.mxu0 %v1883
    %1916 = vmatprep.subr.mxu0 0.0
    %1917 = vmatpush1.msra.mxu0 %v1884
    %1918 = vmatprep.subr.mxu0 0.0
    %1919 = vmatpush1.msra.mxu0 %v1885
    %1920 = vmatprep.subr.mxu0 0.0
    %1921 = vmatpush1.msra.mxu0 %v1886
    %1922 = vmatprep.subr.mxu0 0.0
    %1923 = vmatpush1.msra.mxu0 %v1887
    %1924 = vmatprep.subr.mxu0 0.0
    %1925 = vmatpush1.msra.mxu0 %v1888
    %1926 = vmatprep.subr.mxu0 0.0
    %1927 = vmatpush1.msra.mxu0 %v1889
    %1928 = vmatprep.subr.mxu0 0.0
    %1929 = vmatpush1.msra.mxu0 %v1890
    %1930 = vmatprep.subr.mxu0 0.0
    %1931 = vmatpush1.msra.mxu0 0.0
    %1932 = vmatprep.subr.mxu0 0.0
    %1933 = vmatpush1.msra.mxu0 0.0
    %1934 = vmatprep.subr.mxu0 0.0
    %1935 = vmatpush1.msra.mxu0 0.0
    %1936 = vmatprep.subr.mxu0 0.0
    %1937 = vmatpush1.msra.mxu0 0.0
    %1938 = vmatprep.subr.mxu0 0.0
    %1939 = vmatpush1.msra.mxu0 0.0
    %1940 = vmatprep.subr.mxu0 0.0
    %1941 = vmatpush1.msra.mxu0 0.0
    %1942 = vmatprep.subr.mxu0 0.0
    %1943 = vmatpush1.msra.mxu0 0.0
    %1944 = vmatprep.subr.mxu0 0.0
    %1945 = vmatpush1.msra.mxu0 0.0
    %1946 = vmatprep.subr.mxu0 0.0
    %1947 = vmatpush1.msra.mxu0 0.0
    %1948 = vmatprep.subr.mxu0 0.0
    %1949 = vmatpush1.msra.mxu0 0.0
    %1950 = vmatprep.subr.mxu0 0.0
    %1951 = vmatpush1.msra.mxu0 0.0
    %1952 = vmatprep.subr.mxu0 0.0
    %1953 = vmatpush1.msra.mxu0 0.0
    %1954 = vmatprep.subr.mxu0 0.0
    %1955 = vmatpush1.msra.mxu0 0.0
    %1956 = vmatprep.subr.mxu0 0.0
    %1957 = vmatpush1.msra.mxu0 0.0
    %1958 = vmatprep.subr.mxu0 0.0
    %1959 = vmatpush1.msra.mxu0 0.0
    %1960 = vmatprep.subr.mxu0 0.0
    %1961 = vmatpush1.msra.mxu0 0.0
    %1962 = vmatprep.mubr.f32.mxu0 0.0
    %1963 = vmatmul.mubr.f32.gmra.mrb[0].mxu0 %v1874
    %v1964 = vpop.f32.mrb[0].mxu0
    %v1965 = vadd.f32 %v1896, %v1964
    %v1966 = vpop.f32.mrb[0].mxu0
    %1967 = vdwg.mxu0
    %v1968 = vmax.f32 %v1965, 0.0
    %v1969 = vld [vmem:[#allocation8] sm:$0xff]
    %v1970 = vld [vmem:[#allocation8 + $0x8] sm:$0xff]
    %v1971 = vld [vmem:[#allocation8 + $0x10] sm:$0xff]
    %v1972 = vld [vmem:[#allocation8 + $0x18] sm:$0xff]
    %v1973 = vld [vmem:[#allocation8 + $0x20] sm:$0xff]
    %v1974 = vld [vmem:[#allocation8 + $0x28] sm:$0xff]
    %v1975 = vld [vmem:[#allocation8 + $0x30] sm:$0xff]
    %v1976 = vld [vmem:[#allocation8 + $0x38] sm:$0xff]
    %v1977 = vld [vmem:[#allocation8 + $0x40] sm:$0xff]
    %v1978 = vld [vmem:[#allocation8 + $0x48] sm:$0xff]
    %v1979 = vld [vmem:[#allocation8 + $0x50] sm:$0xff]
    %v1980 = vld [vmem:[#allocation8 + $0x58] sm:$0xff]
    %v1981 = vld [vmem:[#allocation8 + $0x60] sm:$0xff]
    %v1982 = vld [vmem:[#allocation8 + $0x68] sm:$0xff]
    %v1983 = vld [vmem:[#allocation8 + $0x70] sm:$0xff]
    %v1984 = vld [vmem:[#allocation8 + $0x78] sm:$0xff]
    %v1985 = vld [vmem:[%s7] sm:$0x1]
    %v1987 = vlaneseq
    %v1988 = vshrl.u32 %v1987, 7
    %v1989 = vsub.s32 0, %v1988
    %v1990 = vrot.slane %v1985, %v1989
    %1992 = vmatprep.subr.mxu0 0.0
    %1993 = vmatpush1.msra.mxu0 %v1969
    %1994 = vmatprep.subr.mxu0 0.0
    %1995 = vmatpush1.msra.mxu0 %v1970
    %1996 = vmatprep.subr.mxu0 0.0
    %1997 = vmatpush1.msra.mxu0 %v1971
    %1998 = vmatprep.subr.mxu0 0.0
    %1999 = vmatpush1.msra.mxu0 %v1972
    %2000 = vmatprep.subr.mxu0 0.0
    %2001 = vmatpush1.msra.mxu0 %v1973
    %2002 = vmatprep.subr.mxu0 0.0
    %2003 = vmatpush1.msra.mxu0 %v1974
    %2004 = vmatprep.subr.mxu0 0.0
    %2005 = vmatpush1.msra.mxu0 %v1975
    %2006 = vmatprep.subr.mxu0 0.0
    %2007 = vmatpush1.msra.mxu0 %v1976
    %2008 = vmatprep.subr.mxu0 0.0
    %2009 = vmatpush1.msra.mxu0 %v1977
    %2010 = vmatprep.subr.mxu0 0.0
    %2011 = vmatpush1.msra.mxu0 %v1978
    %2012 = vmatprep.subr.mxu0 0.0
    %2013 = vmatpush1.msra.mxu0 %v1979
    %2014 = vmatprep.subr.mxu0 0.0
    %2015 = vmatpush1.msra.mxu0 %v1980
    %2016 = vmatprep.subr.mxu0 0.0
    %2017 = vmatpush1.msra.mxu0 %v1981
    %2018 = vmatprep.subr.mxu0 0.0
    %2019 = vmatpush1.msra.mxu0 %v1982
    %2020 = vmatprep.subr.mxu0 0.0
    %2021 = vmatpush1.msra.mxu0 %v1983
    %2022 = vmatprep.subr.mxu0 0.0
    %2023 = vmatpush1.msra.mxu0 %v1984
    %2024 = vmatprep.subr.mxu0 0.0
    %2025 = vmatpush1.msra.mxu0 0.0
    %2026 = vmatprep.subr.mxu0 0.0
    %2027 = vmatpush1.msra.mxu0 0.0
    %2028 = vmatprep.subr.mxu0 0.0
    %2029 = vmatpush1.msra.mxu0 0.0
    %2030 = vmatprep.subr.mxu0 0.0
    %2031 = vmatpush1.msra.mxu0 0.0
    %2032 = vmatprep.subr.mxu0 0.0
    %2033 = vmatpush1.msra.mxu0 0.0
    %2034 = vmatprep.subr.mxu0 0.0
    %2035 = vmatpush1.msra.mxu0 0.0
    %2036 = vmatprep.subr.mxu0 0.0
    %2037 = vmatpush1.msra.mxu0 0.0
    %2038 = vmatprep.subr.mxu0 0.0
    %2039 = vmatpush1.msra.mxu0 0.0
    %2040 = vmatprep.subr.mxu0 0.0
    %2041 = vmatpush1.msra.mxu0 0.0
    %2042 = vmatprep.subr.mxu0 0.0
    %2043 = vmatpush1.msra.mxu0 0.0
    %2044 = vmatprep.subr.mxu0 0.0
    %2045 = vmatpush1.msra.mxu0 0.0
    %2046 = vmatprep.subr.mxu0 0.0
    %2047 = vmatpush1.msra.mxu0 0.0
    %2048 = vmatprep.subr.mxu0 0.0
    %2049 = vmatpush1.msra.mxu0 0.0
    %2050 = vmatprep.subr.mxu0 0.0
    %2051 = vmatpush1.msra.mxu0 0.0
    %2052 = vmatprep.subr.mxu0 0.0
    %2053 = vmatpush1.msra.mxu0 0.0
    %2054 = vmatprep.subr.mxu0 0.0
    %2055 = vmatpush1.msra.mxu0 0.0
    %2056 = vmatprep.mubr.f32.mxu0 0.0
    %2057 = vmatmul.mubr.f32.gmra.mrb[0].mxu0 %v1968
    %v2058 = vpop.f32.mrb[0].mxu0
    %v2059 = vadd.f32 %v1990, %v2058
    %v2060 = vpop.f32.mrb[0].mxu0
    %2061 = vdwg.mxu0
    %v2062 = vmax.f32 %v2059, 0.0
    %2063 = vst [vmem:[#allocation9] sm:$0xff] %v2062
    // Predicated region
    $region46: #{tpu_custom_call.1} parent=1 // pred_check
      _
    $region47: #{tpu_custom_call.1} parent=1 // pred_check_branch
      %2065 = sbr.rel (0) target = $region49
    $region48: #{tpu_custom_call.1} parent=1 // pred_region
      %s2067 = ssub.s32 128, 128
      %2068 = vsyncadd [#allocation5], %s2067
      %s2070 = sshll.u32 [#allocation9], 4
      %s2071 = int_to_ptr.vmem [resolvable:$true] %s2070
      %2073 = dma.vmem_to_hbm [thread:$0]  %s2071, 128, %s8, [#allocation5]
    $region49: #{tpu_custom_call.1} parent=1 // pred_fallthru
      _
    // Predicated region
    $region50: #{tpu_custom_call.1} parent=1 // pred_check
      _
    $region51: #{tpu_custom_call.1} parent=1 // pred_check_branch
      %2075 = sbr.rel (0) target = $region53
    $region52: #{tpu_custom_call.1} parent=1 // pred_region
      %2076 = dma.done [#allocation5], 128
    $region53: #{tpu_custom_call.1} parent=1 // pred_fallthru
      _
    %2077 = vsyncpa [#allocation4], 1
    %2078 = vsyncpa [#allocation7], 1
    %2079 = vsyncpa [#allocation5], 1

</llo_original>
